<compile_context>
chip_gen: v7x
topology: tpu7x:2x2x1
jax: 0.10.0
libtpu: 0.0.40
codegen_flags: <defaults>
</compile_context>

<pallas_src>
import jax
import jax.numpy as jnp
from jax.experimental import pallas as pl
from jax.experimental.pallas import tpu as pltpu

SCALE = 0.1          # module's scale; scale=0.0 degenerates to plain LayerNorm
TEMP = 1.0           # exp(s) without a running max is safe because temp == 1.0
INV_TEMP = 1.0 / TEMP
LN_EPS = 1e-6
L2_EPS = 1e-12


def _contranorm_kernel(xq_ref, xk_ref, gamma_ref, beta_ref, o_ref,
                       qn_sc, l_sc, acc_sc):
    # Block shapes (leading size-1 batch dim squeezed away):
    #   xq_ref: (TQ, D)   query rows (resident across the kv axis)
    #   xk_ref: (TK, D)   key rows (streamed along the kv axis)
    #   gamma_ref / beta_ref: (1, D)
    #   o_ref:  (TQ, D)
    # Scratch (persists across the kv axis):
    #   qn_sc:  (TQ, D)  MXU-dtype cache of L2-normalized, 1/temp-scaled q rows
    #   l_sc:   (TQ, 1)  f32 softmax denominator
    #   acc_sc: (TQ, D)  f32 accumulator for sum_k exp(s_qk) * x_k
    ki = pl.program_id(2)
    mxu_dtype = qn_sc.dtype

    @pl.when(ki == 0)
    def _():
        l_sc[...] = jnp.zeros_like(l_sc)
        acc_sc[...] = jnp.zeros_like(acc_sc)
        # q-side F.normalize(dim=-1), computed ONCE per q tile.  Clamp the
        # sum-of-squares at eps^2 to keep max(norm, eps) semantics, and fold
        # 1/temp into the scale so the MXU output is already the scaled logit.
        xq_f = xq_ref[...].astype(jnp.float32)
        q_ss = jnp.sum(xq_f * xq_f, axis=-1, keepdims=True)
        q_scale = jax.lax.rsqrt(jnp.maximum(q_ss, L2_EPS * L2_EPS)) * INV_TEMP
        qn_sc[...] = (xq_f * q_scale).astype(mxu_dtype)

    # --- K-side normalize (per kv step; only TK*D of VALU/EUP work). ---
    xk = xk_ref[...]
    xk_f = xk.astype(jnp.float32)
    k_ss = jnp.sum(xk_f * xk_f, axis=-1, keepdims=True)
    kn = (xk_f * jax.lax.rsqrt(jnp.maximum(k_ss, L2_EPS * L2_EPS))).astype(mxu_dtype)

    # --- similarity tile on the MXU: contract the feature dim of both
    #     operands directly (no transpose), f32 accumulation. ---
    s = jax.lax.dot_general(
        qn_sc[...], kn, (((1,), (1,)), ((), ())),
        preferred_element_type=jnp.float32)                     # (TQ, TK)

    # Cosine-similarity logits are bounded (|s| <= 1/temp), so no running max
    # is needed: plain exp + plain accumulation.
    p = jnp.exp(s)                                              # (TQ, TK) f32
    l_sc[...] += jnp.sum(p, axis=-1, keepdims=True)
    acc_sc[...] += jnp.dot(p.astype(mxu_dtype), xk.astype(mxu_dtype),
                           preferred_element_type=jnp.float32)  # (TQ, D) f32

    # --- finalize once per q tile: softmax normalize, ContraNorm, LayerNorm ---
    @pl.when(ki == pl.num_programs(2) - 1)
    def _():
        xq_f = xq_ref[...].astype(jnp.float32)
        factor = SCALE / l_sc[...]          # exact reciprocal, off the hot path
        y = xq_f - acc_sc[...] * factor
        mean = jnp.mean(y, axis=-1, keepdims=True)
        cen = y - mean
        var = jnp.mean(cen * cen, axis=-1, keepdims=True)
        yhat = cen * jax.lax.rsqrt(var + LN_EPS)
        gamma = gamma_ref[...].astype(jnp.float32)              # (1, D)
        beta = beta_ref[...].astype(jnp.float32)                # (1, D)
        o_ref[...] = (yhat * gamma + beta).astype(o_ref.dtype)


def _pick_tile(n, target):
    """Largest t <= target with n % t == 0 and t % 8 == 0 (else the full dim)."""
    t = min(target, n)
    while t >= 8:
        if n % t == 0 and t % 8 == 0:
            return t
        t -= 1
    return n  # full dim is always a legal block


def contranorm(x, gamma, beta, *, tq=1024, tk=512, bf16_mxu=True,
               vmem_budget_bytes=40 * 1024 * 1024):
    B, N, D = x.shape
    itemsize = jnp.dtype(x.dtype).itemsize
    mxu_dtype = jnp.bfloat16 if bf16_mxu else x.dtype
    mxu_itemsize = jnp.dtype(mxu_dtype).itemsize

    def footprint(tq_, tk_):
        return (2 * tq_ * D * itemsize              # xq (double-buffered)
                + 2 * tk_ * D * itemsize            # xk (double-buffered)
                + 2 * tq_ * D * itemsize            # out (double-buffered)
                + 4 * D * 4                         # gamma / beta
                + tq_ * D * mxu_itemsize            # qn cache
                + tq_ * D * 4 + tq_ * 4             # f32 acc + denom
                + tq_ * tk_ * (8 + mxu_itemsize))   # s / p / p-cast intermediates

    tq = _pick_tile(N, tq)
    tk = _pick_tile(N, tk)
    # Shrink tiles until the working set fits a v7x-safe VMEM budget
    # (v7x: 64 MiB physical, 32 MiB scoped default; v5e/v6e: 128 MiB).
    for _ in range(16):
        if footprint(tq, tk) <= vmem_budget_bytes:
            break
        if tq >= tk and tq > 128:
            tq = _pick_tile(N, max(128, tq // 2))
        elif tk > 128:
            tk = _pick_tile(N, max(128, tk // 2))
        else:
            break

    # v7x megacore: keep >= 2 grid points on the parallel (batch, q-tile) axes
    # so the second TensorCore gets work.
    if B * (N // tq) < 2:
        tq2 = _pick_tile(N, max(8, tq // 2))
        if tq2 < tq:
            tq = tq2

    gamma2 = gamma.reshape(1, D)
    beta2 = beta.reshape(1, D)

    cost = pl.CostEstimate(
        flops=4 * B * N * N * D,                    # two N x N x D matmuls
        transcendentals=B * N * N,                  # softmax exp
        bytes_accessed=(2 * B * N * D               # q read + out write
                        + B * N * D * (N // tq)     # k re-read per q tile
                        ) * itemsize + 2 * D * 4,
    )

    vmem_limit = int(min(max(footprint(tq, tk) + (4 << 20), 32 << 20), 48 << 20))

    grid = (B, N // tq, N // tk)
    return pl.pallas_call(
        _contranorm_kernel,
        out_shape=jax.ShapeDtypeStruct((B, N, D), x.dtype),
        grid=grid,
        in_specs=[
            pl.BlockSpec((pl.Squeezed(), tq, D), lambda b, qi, ki: (b, qi, 0)),  # q rows
            pl.BlockSpec((pl.Squeezed(), tk, D), lambda b, qi, ki: (b, ki, 0)),  # k rows
            pl.BlockSpec((1, D), lambda b, qi, ki: (0, 0)),                      # gamma
            pl.BlockSpec((1, D), lambda b, qi, ki: (0, 0)),                      # beta
        ],
        out_specs=pl.BlockSpec((pl.Squeezed(), tq, D), lambda b, qi, ki: (b, qi, 0)),
        scratch_shapes=[
            pltpu.VMEM((tq, D), mxu_dtype),     # cached, normalized q rows
            pltpu.VMEM((tq, 1), jnp.float32),   # softmax denominator
            pltpu.VMEM((tq, D), jnp.float32),   # accumulator for exp(s) @ x_k
        ],
        compiler_params=pltpu.CompilerParams(
            dimension_semantics=("parallel", "parallel", "arbitrary"),
            vmem_limit_bytes=vmem_limit,
        ),
        cost_estimate=cost,
    )(x, x, gamma2, beta2)


def contranorm_ref(x, gamma, beta):
    # Pure-JAX reference for verification (f32, highest-precision matmuls).
    x = x.astype(jnp.float32)
    norm = jnp.sqrt(jnp.sum(x * x, axis=-1, keepdims=True))
    xn = x / jnp.maximum(norm, L2_EPS)
    sim = jnp.einsum("bnd,bmd->bnm", xn, xn,
                     precision=jax.lax.Precision.HIGHEST) * INV_TEMP
    sim = jax.nn.softmax(sim, axis=-1)
    x_neg = jnp.einsum("bnm,bmd->bnd", sim, x,
                       precision=jax.lax.Precision.HIGHEST)
    y = x - SCALE * x_neg
    mean = jnp.mean(y, axis=-1, keepdims=True)
    var = jnp.mean((y - mean) ** 2, axis=-1, keepdims=True)
    yhat = (y - mean) / jnp.sqrt(var + LN_EPS)
    return yhat * gamma[None, None, :] + beta[None, None, :]


if __name__ == "__main__":
    key = jax.random.PRNGKey(0)
    # Lane-dense, tile-aligned small shapes (D multiple of 128, N multiple of
    # the row tiles) so the kernel exercises the real tiled path.
    B, N, D = 2, 256, 128
    kx, kg, kb = jax.random.split(key, 3)
    x = jax.random.normal(kx, (B, N, D), dtype=jnp.float32)
    gamma = 1.0 + 0.01 * jax.random.normal(kg, (D,), dtype=jnp.float32)
    beta = 0.01 * jax.random.normal(kb, (D,), dtype=jnp.float32)

    ref = contranorm_ref(x, gamma, beta)

    # Default path: bf16 MXU operands, f32 accumulation.
    out_bf16 = jax.block_until_ready(contranorm(x, gamma, beta))
    assert out_bf16.shape == (B, N, D)
    assert jnp.allclose(out_bf16, ref, atol=2e-3, rtol=2e-3)

    # Full-precision MXU path (closest to PyTorch f32 numerics).
    out_f32 = jax.block_until_ready(contranorm(x, gamma, beta, bf16_mxu=False))
    assert jnp.allclose(out_f32, ref, atol=1e-3, rtol=1e-3)

    print("KERNEL_OK")
</pallas_src>

<mosaic_0001>
module attributes {stable_mosaic.version = 11 : i64} {
  func.func @_contranorm_kernel(%arg0: i32, %arg1: i32, %arg2: i32, %arg3: memref<1x256x128xf32, #tpu.memory_space<vmem>>, %arg4: memref<1x256x128xf32, #tpu.memory_space<vmem>>, %arg5: memref<1x128xf32, #tpu.memory_space<vmem>>, %arg6: memref<1x128xf32, #tpu.memory_space<vmem>>, %arg7: memref<1x256x128xf32, #tpu.memory_space<vmem>>, %arg8: memref<256x128xbf16, #tpu.memory_space<vmem>>, %arg9: memref<256x1xf32, #tpu.memory_space<vmem>>, %arg10: memref<256x128xf32, #tpu.memory_space<vmem>>) attributes {dimension_semantics = [#tpu.dimension_semantics<parallel>, #tpu.dimension_semantics<parallel>, #tpu.dimension_semantics<arbitrary>], iteration_bounds = array<i64: 2, 1, 1>, scalar_prefetch = 0 : i64, scratch_operands = 3 : i64, tpu.core_type = #tpu.core_type<tc>, window_params = [{transform_indices = @transform_0, window_bounds = array<i64: 1, 256, 128>}, {transform_indices = @transform_1, window_bounds = array<i64: 1, 256, 128>}, {pipeline_mode = #tpu.pipeline_mode<synchronous>, transform_indices = @transform_2, window_bounds = array<i64: 1, 128>}, {pipeline_mode = #tpu.pipeline_mode<synchronous>, transform_indices = @transform_3, window_bounds = array<i64: 1, 128>}, {transform_indices = @transform_4, window_bounds = array<i64: 1, 256, 128>}]} {
    %c0_i32 = arith.constant 0 : i32
    %0 = arith.cmpi eq, %arg2, %c0_i32 : i32
    %1 = arith.extui %0 : i1 to i32
    %c0_i32_0 = arith.constant 0 : i32
    %2 = arith.cmpi ne, %1, %c0_i32_0 : i32
    scf.if %2 {
      %cst_19 = arith.constant 0.000000e+00 : f32
      %31 = vector.broadcast %cst_19 : f32 to vector<256x1xf32>
      %c0_20 = arith.constant 0 : index
      %c0_21 = arith.constant 0 : index
      %32 = vector.load %arg9[%c0_20, %c0_21] : memref<256x1xf32, #tpu.memory_space<vmem>>, vector<256x1xf32>
      tpu.vector_store %arg9[%c0_20, %c0_21], %31 {strides = array<i32>} : memref<256x1xf32, #tpu.memory_space<vmem>>, vector<256x1xf32>,
      %cst_22 = arith.constant 0.000000e+00 : f32
      %33 = vector.broadcast %cst_22 : f32 to vector<256x128xf32>
      %c0_23 = arith.constant 0 : index
      %c0_24 = arith.constant 0 : index
      %34 = vector.load %arg10[%c0_23, %c0_24] : memref<256x128xf32, #tpu.memory_space<vmem>>, vector<256x128xf32>
      tpu.vector_store %arg10[%c0_23, %c0_24], %33 {strides = array<i32>} : memref<256x128xf32, #tpu.memory_space<vmem>>, vector<256x128xf32>,
      %c0_25 = arith.constant 0 : index
      %c0_26 = arith.constant 0 : index
      %c0_27 = arith.constant 0 : index
      %35 = vector.load %arg3[%c0_25, %c0_26, %c0_27] : memref<1x256x128xf32, #tpu.memory_space<vmem>>, vector<1x256x128xf32>
      %36 = vector.shape_cast %35 : vector<1x256x128xf32> to vector<256x128xf32>
      %37 = arith.mulf %36, %36 : vector<256x128xf32>
      %cst_28 = arith.constant dense<0.000000e+00> : vector<256xf32>
      %38 = vector.multi_reduction <add>, %37, %cst_28 [1] : vector<256x128xf32> to vector<256xf32>
      %39 = vector.shape_cast %38 : vector<256xf32> to vector<256x1xf32>
      %cst_29 = arith.constant 1.000000e-24 : f32
      %40 = vector.broadcast %cst_29 : f32 to vector<256x1xf32>
      %41 = arith.maximumf %39, %40 : vector<256x1xf32>
      %42 = math.rsqrt %41 : vector<256x1xf32>
      %cst_30 = arith.constant 1.000000e+00 : f32
      %43 = vector.broadcast %cst_30 : f32 to vector<256x1xf32>
      %44 = arith.mulf %42, %43 : vector<256x1xf32>
      %45 = vector.broadcast %44 : vector<256x1xf32> to vector<256x128xf32>
      %46 = arith.mulf %36, %45 : vector<256x128xf32>
      %47 = arith.truncf %46 : vector<256x128xf32> to vector<256x128xbf16>
      %c0_31 = arith.constant 0 : index
      %c0_32 = arith.constant 0 : index
      %48 = vector.load %arg8[%c0_31, %c0_32] : memref<256x128xbf16, #tpu.memory_space<vmem>>, vector<256x128xbf16>
      tpu.vector_store %arg8[%c0_31, %c0_32], %47 {strides = array<i32>} : memref<256x128xbf16, #tpu.memory_space<vmem>>, vector<256x128xbf16>,
    } else {
    }
    %c0 = arith.constant 0 : index
    %c0_1 = arith.constant 0 : index
    %c0_2 = arith.constant 0 : index
    %3 = vector.load %arg4[%c0, %c0_1, %c0_2] : memref<1x256x128xf32, #tpu.memory_space<vmem>>, vector<1x256x128xf32>
    %4 = vector.shape_cast %3 : vector<1x256x128xf32> to vector<256x128xf32>
    %5 = arith.mulf %4, %4 : vector<256x128xf32>
    %cst = arith.constant dense<0.000000e+00> : vector<256xf32>
    %6 = vector.multi_reduction <add>, %5, %cst [1] : vector<256x128xf32> to vector<256xf32>
    %7 = vector.shape_cast %6 : vector<256xf32> to vector<256x1xf32>
    %cst_3 = arith.constant 1.000000e-24 : f32
    %8 = vector.broadcast %cst_3 : f32 to vector<256x1xf32>
    %9 = arith.maximumf %7, %8 : vector<256x1xf32>
    %10 = math.rsqrt %9 : vector<256x1xf32>
    %11 = vector.broadcast %10 : vector<256x1xf32> to vector<256x128xf32>
    %12 = arith.mulf %4, %11 : vector<256x128xf32>
    %13 = arith.truncf %12 : vector<256x128xf32> to vector<256x128xbf16>
    %c0_4 = arith.constant 0 : index
    %c0_5 = arith.constant 0 : index
    %14 = vector.load %arg8[%c0_4, %c0_5] : memref<256x128xbf16, #tpu.memory_space<vmem>>, vector<256x128xbf16>
    %cst_6 = arith.constant dense<0.000000e+00> : vector<256x256xf32>
    %15 = tpu.matmul %14, %13, %cst_6 {dimension_numbers = #tpu.dot_dimension_numbers<[1], [1], [0], [0], [0, 0, 1, 0], [], []>} : vector<256x128xbf16>, vector<256x128xbf16>, vector<256x256xf32> -> vector<256x256xf32>
    %16 = math.exp %15 : vector<256x256xf32>
    %c0_7 = arith.constant 0 : index
    %c0_8 = arith.constant 0 : index
    %17 = vector.load %arg9[%c0_7, %c0_8] : memref<256x1xf32, #tpu.memory_space<vmem>>, vector<256x1xf32>
    %cst_9 = arith.constant dense<0.000000e+00> : vector<256xf32>
    %18 = vector.multi_reduction <add>, %16, %cst_9 [1] : vector<256x256xf32> to vector<256xf32>
    %19 = vector.shape_cast %18 : vector<256xf32> to vector<256x1xf32>
    %20 = arith.addf %17, %19 : vector<256x1xf32>
    %c0_10 = arith.constant 0 : index
    %c0_11 = arith.constant 0 : index
    %21 = vector.load %arg9[%c0_10, %c0_11] : memref<256x1xf32, #tpu.memory_space<vmem>>, vector<256x1xf32>
    tpu.vector_store %arg9[%c0_10, %c0_11], %20 {strides = array<i32>} : memref<256x1xf32, #tpu.memory_space<vmem>>, vector<256x1xf32>,
    %c0_12 = arith.constant 0 : index
    %c0_13 = arith.constant 0 : index
    %22 = vector.load %arg10[%c0_12, %c0_13] : memref<256x128xf32, #tpu.memory_space<vmem>>, vector<256x128xf32>
    %23 = arith.truncf %16 : vector<256x256xf32> to vector<256x256xbf16>
    %24 = arith.truncf %4 : vector<256x128xf32> to vector<256x128xbf16>
    %cst_14 = arith.constant dense<0.000000e+00> : vector<256x128xf32>
    %25 = tpu.matmul %23, %24, %cst_14 {dimension_numbers = #tpu.dot_dimension_numbers<[1], [0], [0], [1], [0, 0, 1, 1], [], []>} : vector<256x256xbf16>, vector<256x128xbf16>, vector<256x128xf32> -> vector<256x128xf32>
    %26 = arith.addf %22, %25 : vector<256x128xf32>
    %c0_15 = arith.constant 0 : index
    %c0_16 = arith.constant 0 : index
    %27 = vector.load %arg10[%c0_15, %c0_16] : memref<256x128xf32, #tpu.memory_space<vmem>>, vector<256x128xf32>
    tpu.vector_store %arg10[%c0_15, %c0_16], %26 {strides = array<i32>} : memref<256x128xf32, #tpu.memory_space<vmem>>, vector<256x128xf32>,
    %c0_i32_17 = arith.constant 0 : i32
    %28 = arith.cmpi eq, %arg2, %c0_i32_17 : i32
    %29 = arith.extui %28 : i1 to i32
    %c0_i32_18 = arith.constant 0 : i32
    %30 = arith.cmpi ne, %29, %c0_i32_18 : i32
    scf.if %30 {
      %c0_19 = arith.constant 0 : index
      %c0_20 = arith.constant 0 : index
      %c0_21 = arith.constant 0 : index
      %31 = vector.load %arg3[%c0_19, %c0_20, %c0_21] : memref<1x256x128xf32, #tpu.memory_space<vmem>>, vector<1x256x128xf32>
      %32 = vector.shape_cast %31 : vector<1x256x128xf32> to vector<256x128xf32>
      %c0_22 = arith.constant 0 : index
      %c0_23 = arith.constant 0 : index
      %33 = vector.load %arg9[%c0_22, %c0_23] : memref<256x1xf32, #tpu.memory_space<vmem>>, vector<256x1xf32>
      %cst_24 = arith.constant 1.000000e-01 : f32
      %34 = vector.broadcast %cst_24 : f32 to vector<256x1xf32>
      %35 = arith.divf %34, %33 : vector<256x1xf32>
      %c0_25 = arith.constant 0 : index
      %c0_26 = arith.constant 0 : index
      %36 = vector.load %arg10[%c0_25, %c0_26] : memref<256x128xf32, #tpu.memory_space<vmem>>, vector<256x128xf32>
      %37 = vector.broadcast %35 : vector<256x1xf32> to vector<256x128xf32>
      %38 = arith.mulf %36, %37 : vector<256x128xf32>
      %39 = arith.subf %32, %38 : vector<256x128xf32>
      %cst_27 = arith.constant dense<0.000000e+00> : vector<256xf32>
      %40 = vector.multi_reduction <add>, %39, %cst_27 [1] : vector<256x128xf32> to vector<256xf32>
      %41 = vector.shape_cast %40 : vector<256xf32> to vector<256x1xf32>
      %cst_28 = arith.constant 1.280000e+02 : f32
      %42 = vector.broadcast %cst_28 : f32 to vector<256x1xf32>
      %43 = arith.divf %41, %42 : vector<256x1xf32>
      %44 = vector.broadcast %43 : vector<256x1xf32> to vector<256x128xf32>
      %45 = arith.subf %39, %44 : vector<256x128xf32>
      %46 = arith.mulf %45, %45 : vector<256x128xf32>
      %cst_29 = arith.constant dense<0.000000e+00> : vector<256xf32>
      %47 = vector.multi_reduction <add>, %46, %cst_29 [1] : vector<256x128xf32> to vector<256xf32>
      %48 = vector.shape_cast %47 : vector<256xf32> to vector<256x1xf32>
      %cst_30 = arith.constant 1.280000e+02 : f32
      %49 = vector.broadcast %cst_30 : f32 to vector<256x1xf32>
      %50 = arith.divf %48, %49 : vector<256x1xf32>
      %cst_31 = arith.constant 9.99999997E-7 : f32
      %51 = vector.broadcast %cst_31 : f32 to vector<256x1xf32>
      %52 = arith.addf %50, %51 : vector<256x1xf32>
      %53 = math.rsqrt %52 : vector<256x1xf32>
      %54 = vector.broadcast %53 : vector<256x1xf32> to vector<256x128xf32>
      %55 = arith.mulf %45, %54 : vector<256x128xf32>
      %c0_32 = arith.constant 0 : index
      %c0_33 = arith.constant 0 : index
      %56 = vector.load %arg5[%c0_32, %c0_33] : memref<1x128xf32, #tpu.memory_space<vmem>>, vector<1x128xf32>
      %c0_34 = arith.constant 0 : index
      %c0_35 = arith.constant 0 : index
      %57 = vector.load %arg6[%c0_34, %c0_35] : memref<1x128xf32, #tpu.memory_space<vmem>>, vector<1x128xf32>
      %58 = vector.broadcast %56 : vector<1x128xf32> to vector<256x128xf32>
      %59 = arith.mulf %55, %58 : vector<256x128xf32>
      %60 = vector.broadcast %57 : vector<1x128xf32> to vector<256x128xf32>
      %61 = arith.addf %59, %60 : vector<256x128xf32>
      %c0_36 = arith.constant 0 : index
      %c0_37 = arith.constant 0 : index
      %c0_38 = arith.constant 0 : index
      %62 = vector.load %arg7[%c0_36, %c0_37, %c0_38] : memref<1x256x128xf32, #tpu.memory_space<vmem>>, vector<1x256x128xf32>
      %63 = vector.shape_cast %62 : vector<1x256x128xf32> to vector<256x128xf32>
      %64 = vector.shape_cast %61 : vector<256x128xf32> to vector<1x256x128xf32>
      tpu.vector_store %arg7[%c0_36, %c0_37, %c0_38], %64 {strides = array<i32>} : memref<1x256x128xf32, #tpu.memory_space<vmem>>, vector<1x256x128xf32>,
    } else {
    }
    return
  }
  func.func @transform_0(%arg0: i32, %arg1: i32, %arg2: i32) -> (i32, i32, i32) {
    %c0_i32 = arith.constant 0 : i32
    %c0_i32_0 = arith.constant 0 : i32
    return %arg0, %arg1, %c0_i32 : i32, i32, i32
  }
  func.func @transform_1(%arg0: i32, %arg1: i32, %arg2: i32) -> (i32, i32, i32) {
    %c0_i32 = arith.constant 0 : i32
    %c0_i32_0 = arith.constant 0 : i32
    return %arg0, %arg2, %c0_i32 : i32, i32, i32
  }
  func.func @transform_2(%arg0: i32, %arg1: i32, %arg2: i32) -> (i32, i32) {
    %c0_i32 = arith.constant 0 : i32
    %c0_i32_0 = arith.constant 0 : i32
    %c0_i32_1 = arith.constant 0 : i32
    return %c0_i32, %c0_i32_0 : i32, i32
  }
  func.func @transform_3(%arg0: i32, %arg1: i32, %arg2: i32) -> (i32, i32) {
    %c0_i32 = arith.constant 0 : i32
    %c0_i32_0 = arith.constant 0 : i32
    %c0_i32_1 = arith.constant 0 : i32
    return %c0_i32, %c0_i32_0 : i32, i32
  }
  func.func @transform_4(%arg0: i32, %arg1: i32, %arg2: i32) -> (i32, i32, i32) {
    %c0_i32 = arith.constant 0 : i32
    %c0_i32_0 = arith.constant 0 : i32
    return %arg0, %arg1, %c0_i32 : i32, i32, i32
  }
}

</mosaic_0001>

<llo_original>
// kernel: tpu_custom_call.1
$region0: #{tpu_custom_call.1}
  #allocation0 [shape = 'u32[]', space=smem, size = 0x4, offset = 0x4, fixed_abs, tag = 'smem constant byte address 0x4 - core index']
  #allocation1 [shape = 'u32[144,128]{1,0:T(1,128)}', space=vmem, size = 0x12000, scoped, tag = 'internal scratch']
  #allocation2 [shape = 'bf16[256,128]{1,0:T(16,128)(2,1)}', space=vmem, size = 0x10000, scoped, tag = 'scratch operand']
  #allocation3 [shape = 'f32[256,1]{1,0:T(8,128)}', space=vmem, size = 0x20000, scoped, tag = 'scratch operand']
  #allocation4 [shape = 'f32[256,128]{1,0:T(8,128)}', space=vmem, size = 0x20000, scoped, tag = 'scratch operand']
  %s0 = inlined_call_operand.hbm [shape: f32[2,256,128], index: 0, kind: input, shape index: {}]
  %s1 = inlined_call_operand.hbm [shape: f32[2,256,128], index: 1, kind: input, shape index: {}]
  %s2 = inlined_call_operand.vmem [shape: f32[1,128], index: 2, kind: input, shape index: {}]
  %s3 = inlined_call_operand.vmem [shape: f32[1,128], index: 3, kind: input, shape index: {}]
  %s4 = inlined_call_operand.hbm [shape: f32[2,256,128], index: 4, kind: output, shape index: {}]
  %s5 = sld [smem:[#allocation0]]
  $region65: #{tpu_custom_call.1} parent=0
    _
  %s7 = ssub.s32 1, %s5
  %s8 = scalar_select 0, %s7, %s5
  $region1: #{tpu_custom_call.1} parent=0
    #allocation5 [shape = 'u8[262144]{0}', space=vmem, size = 0x40000, scoped, tag = 'input window, operand 0']
    #allocation6 [shape = 's32[2]{0}', space=sflag, size = 0x8, scoped, tag = 'scoped memory for tpu_custom_call.1']
    #allocation7 [shape = 's32[2]{0}', space=sflag, size = 0x8, scoped, tag = 'scoped memory for tpu_custom_call.1']
    #allocation8 [shape = 'u8[262144]{0}', space=vmem, size = 0x40000, scoped, tag = 'input window, operand 1']
    #allocation9 [shape = 's32[2]{0}', space=sflag, size = 0x8, scoped, tag = 'scoped memory for tpu_custom_call.1']
    #allocation10 [shape = 'u8[262144]{0}', space=vmem, size = 0x40000, scoped, tag = 'output window, operand 0']
    %9 = vsyncpa [#allocation6], 0
    %s10 = scalar_lea.sflag [#allocation6], 1
    %11 = vsyncpa %s10, 0
    %12 = vsyncpa [#allocation9], 0
    %s13 = scalar_lea.sflag [#allocation9], 1
    %14 = vsyncpa %s13, 0
    %15 = vsyncpa [#allocation7], 0
    %s16 = scalar_lea.sflag [#allocation7], 1
    %17 = vsyncpa %s16, 0
    loop: start=0, step=1, limit=4
    $region2: #{tpu_custom_call.1} parent=1 // loop_pre_header
      _
    $region3: #{tpu_custom_call.1} parent=1 // loop_header
      %s19 = sphi 0, %s23
      %p20 = scmp.ge.s32.totalorder %s19, 4
      %s26 = sphi 0, %s45
      %s27 = sphi 0, %s41
      %s28 = sphi 0, %s37
      %s29 = sphi 0, %s26
      %s30 = sphi 0, %s27
      %s31 = sphi 0, %s28
      %s32 = sphi 0, %s29
      %s33 = sphi 0, %s30
      %s34 = sphi 0, %s31
      %s50 = sphi 0, %s52
      %s53 = sphi 0, %s50
      %s54 = sphi 0, %s53
      %s70 = sphi 0, %s54
      %s78 = sphi 0, %s80
      %s81 = sphi 0, %s78
      %s82 = sphi 0, %s81
      %s98 = sphi 0, %s82
      %s102 = sphi 0, %s102
      %s104 = sphi 0, %s102
      %s105 = sphi 0, %s104
      %s119 = sphi 0, %s105
      %s123 = sphi 0, %s123
      %s125 = sphi 0, %s123
      %s126 = sphi 0, %s125
      %s140 = sphi 0, %s126
      %s148 = sphi 0, %s150
      %s151 = sphi 0, %s148
      %s152 = sphi 0, %s151
      %s168 = sphi 0, %s152
    $region4: #{tpu_custom_call.1} parent=1 // loop_header_branch
      %22 = sbr.rel (%p20) target = $region8
    $region5: #{tpu_custom_call.1} parent=1 // loop_body
      %s24 = ssub.s32 %s19, 1
      %s25 = ssub.s32 %s19, 2
      %s35 = sadd.s32 1, %s28
      %p36 = scmp.ge.s32.totalorder %s35, 1
      %s37 = scalar_select %p36, 0, %s35
      %s38 = sadd.s32 1, %s27
      %s39 = scalar_select %p36, %s38, %s27
      %p40 = scmp.ge.s32.totalorder %s39, 1
      %s41 = scalar_select %p40, 0, %s39
      %s42 = sadd.s32 1, %s26
      %s43 = scalar_select %p40, %s42, %s26
      %p44 = scmp.ge.s32.totalorder %s43, 2
      %s45 = scalar_select %p44, 0, %s43
      %s46 = ssub.s32 %s26, %s45
      %s47 = ssub.s32 %s27, %s41
      %s48 = sor.u32 %s46, %s47
      %p49 = scmp.eq.s32.totalorder %s48, 0
      %s51 = sadd.s32 %s50, 1
      %s52 = scalar_select %p49, %s50, %s51
      %p55 = pneg %p49
      %p56 = scmp.eq.s32.totalorder %s19, 1
      %p57 = por %p55, %p56
      %p58 = scmp.ne.s32.totalorder %s50, %s53
      %p59 = scmp.eq.s32.totalorder %s19, 0
      %p60 = por %p58, %p59
      %p61 = scmp.ne.s32.totalorder %s50, %s53
      %p62 = scmp.eq.s32.totalorder %s24, 1
      %p63 = por %p61, %p62
      %p64 = scmp.ne.s32.totalorder %s53, %s54
      %p65 = scmp.eq.s32.totalorder %s24, 0
      %p66 = por %p64, %p65
      %p67 = scmp.ne.s32.totalorder %s53, %s54
      %p68 = scmp.eq.s32.totalorder %s25, 1
      %p69 = por %p67, %p68
      %p71 = scmp.ne.s32.totalorder %s54, %s70
      %p72 = scmp.eq.s32.totalorder %s25, 0
      %p73 = por %p71, %p72
      %s74 = ssub.s32 %s26, %s45
      %s75 = ssub.s32 %s28, %s37
      %s76 = sor.u32 %s74, %s75
      %p77 = scmp.eq.s32.totalorder %s76, 0
      %s79 = sadd.s32 %s78, 1
      %s80 = scalar_select %p77, %s78, %s79
      %p83 = pneg %p77
      %p84 = scmp.eq.s32.totalorder %s19, 1
      %p85 = por %p83, %p84
      %p86 = scmp.ne.s32.totalorder %s78, %s81
      %p87 = scmp.eq.s32.totalorder %s19, 0
      %p88 = por %p86, %p87
      %p89 = scmp.ne.s32.totalorder %s78, %s81
      %p90 = scmp.eq.s32.totalorder %s24, 1
      %p91 = por %p89, %p90
      %p92 = scmp.ne.s32.totalorder %s81, %s82
      %p93 = scmp.eq.s32.totalorder %s24, 0
      %p94 = por %p92, %p93
      %p95 = scmp.ne.s32.totalorder %s81, %s82
      %p96 = scmp.eq.s32.totalorder %s25, 1
      %p97 = por %p95, %p96
      %p99 = scmp.ne.s32.totalorder %s82, %s98
      %p100 = scmp.eq.s32.totalorder %s25, 0
      %p101 = por %p99, %p100
      %s103 = sadd.s32 %s102, 1
      %p106 = scmp.eq.s32.totalorder %s19, 1
      %p107 = scmp.ne.s32.totalorder %s102, %s104
      %p108 = scmp.eq.s32.totalorder %s19, 0
      %p109 = por %p107, %p108
      %p110 = scmp.ne.s32.totalorder %s102, %s104
      %p111 = scmp.eq.s32.totalorder %s24, 1
      %p112 = por %p110, %p111
      %p113 = scmp.ne.s32.totalorder %s104, %s105
      %p114 = scmp.eq.s32.totalorder %s24, 0
      %p115 = por %p113, %p114
      %p116 = scmp.ne.s32.totalorder %s104, %s105
      %p117 = scmp.eq.s32.totalorder %s25, 1
      %p118 = por %p116, %p117
      %p120 = scmp.ne.s32.totalorder %s105, %s119
      %p121 = scmp.eq.s32.totalorder %s25, 0
      %p122 = por %p120, %p121
      %s124 = sadd.s32 %s123, 1
      %p127 = scmp.eq.s32.totalorder %s19, 1
      %p128 = scmp.ne.s32.totalorder %s123, %s125
      %p129 = scmp.eq.s32.totalorder %s19, 0
      %p130 = por %p128, %p129
      %p131 = scmp.ne.s32.totalorder %s123, %s125
      %p132 = scmp.eq.s32.totalorder %s24, 1
      %p133 = por %p131, %p132
      %p134 = scmp.ne.s32.totalorder %s125, %s126
      %p135 = scmp.eq.s32.totalorder %s24, 0
      %p136 = por %p134, %p135
      %p137 = scmp.ne.s32.totalorder %s125, %s126
      %p138 = scmp.eq.s32.totalorder %s25, 1
      %p139 = por %p137, %p138
      %p141 = scmp.ne.s32.totalorder %s126, %s140
      %p142 = scmp.eq.s32.totalorder %s25, 0
      %p143 = por %p141, %p142
      %s144 = ssub.s32 %s26, %s45
      %s145 = ssub.s32 %s27, %s41
      %s146 = sor.u32 %s144, %s145
      %p147 = scmp.eq.s32.totalorder %s146, 0
      %s149 = sadd.s32 %s148, 1
      %s150 = scalar_select %p147, %s148, %s149
      %p153 = pneg %p147
      %p154 = scmp.eq.s32.totalorder %s19, 1
      %p155 = por %p153, %p154
      %p156 = scmp.ne.s32.totalorder %s148, %s151
      %p157 = scmp.eq.s32.totalorder %s19, 0
      %p158 = por %p156, %p157
      %p159 = scmp.ne.s32.totalorder %s148, %s151
      %p160 = scmp.eq.s32.totalorder %s24, 1
      %p161 = por %p159, %p160
      %p162 = scmp.ne.s32.totalorder %s151, %s152
      %p163 = scmp.eq.s32.totalorder %s24, 0
      %p164 = por %p162, %p163
      %p165 = scmp.ne.s32.totalorder %s151, %s152
      %p166 = scmp.eq.s32.totalorder %s25, 1
      %p167 = por %p165, %p166
      %p169 = scmp.ne.s32.totalorder %s152, %s168
      %p170 = scmp.eq.s32.totalorder %s25, 0
      %p171 = por %p169, %p170
      %p172 = scmp.le.s32.totalorder 1, %s19
      %p173 = scmp.lt.s32.totalorder %s19, 3
      %p174 = pnand %p172, %p173
      %p175 = pneg %p174
      // Predicated region
      $region9: #{tpu_custom_call.1} parent=5 // pred_check
        _
      $region10: #{tpu_custom_call.1} parent=5 // pred_check_branch
        %177 = sbr.rel (%p174) target = $region12
      $region11: #{tpu_custom_call.1} parent=5 // pred_region
        %s178 = ssub.s32 %s19, 1
        // Predicated region
        $region13: #{tpu_custom_call.1} parent=11 // pred_check
          %p179 = pneg %p115
        $region14: #{tpu_custom_call.1} parent=11 // pred_check_branch
          %181 = sbr.rel (%p179) target = $region16
        $region15: #{tpu_custom_call.1} parent=11 // pred_region
          _
        $region16: #{tpu_custom_call.1} parent=11 // pred_fallthru
          _
        // Predicated region
        $region17: #{tpu_custom_call.1} parent=11 // pred_check
          %p182 = pneg %p136
        $region18: #{tpu_custom_call.1} parent=11 // pred_check_branch
          %184 = sbr.rel (%p182) target = $region20
        $region19: #{tpu_custom_call.1} parent=11 // pred_region
          _
        $region20: #{tpu_custom_call.1} parent=11 // pred_fallthru
          _
      $region12: #{tpu_custom_call.1} parent=5 // pred_fallthru
        _
      %p185 = scmp.lt.s32.totalorder %s19, 2
      // Predicated region
      $region21: #{tpu_custom_call.1} parent=5 // pred_check
        %p186 = pneg %p185
      $region22: #{tpu_custom_call.1} parent=5 // pred_check_branch
        %188 = sbr.rel (%p186) target = $region24
      $region23: #{tpu_custom_call.1} parent=5 // pred_region
        // Predicated region
        $region25: #{tpu_custom_call.1} parent=23 // pred_check
          %p189 = pneg %p60
        $region26: #{tpu_custom_call.1} parent=23 // pred_check_branch
          %191 = sbr.rel (%p189) target = $region28
        $region27: #{tpu_custom_call.1} parent=23 // pred_region
          %s192 = sand.u32 %s50, 1
          %s193 = scalar_lea.sflag [#allocation6], %s192
          %s194 = sand.u32 %s50, 1
          %s195 = smul.addr %s194, 256
          %s196 = scalar_lea.vmem [#allocation5], %s195
          %s197 = smul.u32 32, %s27
          %s199 = ssub.s32 4096, 4096
          %200 = vsyncadd %s193, %s199
          %s201 = smul.addr %s26, 32
          %s202 = sadd.s32 %s197, %s201
          %s203 = smul.addr %s202, 128
          %s204 = scalar_lea.hbm %s0, %s203
          %s205 = sshll.u32 %s196, 4
          %s206 = int_to_ptr.vmem [resolvable:$true] %s205
          %211 = dma.hbm_to_vmem [thread:$0]  %s204, 4096, %s206, %s193, 128, 128, 8
        $region28: #{tpu_custom_call.1} parent=23 // pred_fallthru
          _
        // Predicated region
        $region29: #{tpu_custom_call.1} parent=23 // pred_check
          %p212 = pneg %p88
        $region30: #{tpu_custom_call.1} parent=23 // pred_check_branch
          %214 = sbr.rel (%p212) target = $region32
        $region31: #{tpu_custom_call.1} parent=23 // pred_region
          %s215 = sand.u32 %s78, 1
          %s216 = scalar_lea.sflag [#allocation9], %s215
          %s217 = sand.u32 %s78, 1
          %s218 = smul.addr %s217, 256
          %s219 = scalar_lea.vmem [#allocation8], %s218
          %s220 = smul.u32 32, %s28
          %s222 = ssub.s32 4096, 4096
          %223 = vsyncadd %s216, %s222
          %s224 = smul.addr %s26, 32
          %s225 = sadd.s32 %s220, %s224
          %s226 = smul.addr %s225, 128
          %s227 = scalar_lea.hbm %s1, %s226
          %s228 = sshll.u32 %s219, 4
          %s229 = int_to_ptr.vmem [resolvable:$true] %s228
          %234 = dma.hbm_to_vmem [thread:$0]  %s227, 4096, %s229, %s216, 128, 128, 8
        $region32: #{tpu_custom_call.1} parent=23 // pred_fallthru
          _
      $region24: #{tpu_custom_call.1} parent=5 // pred_fallthru
        _
      %p235 = scmp.le.s32.totalorder 1, %s19
      %p236 = scmp.lt.s32.totalorder %s19, 3
      %p237 = pnand %p235, %p236
      %p238 = pneg %p237
      // Predicated region
      $region33: #{tpu_custom_call.1} parent=5 // pred_check
        _
      $region34: #{tpu_custom_call.1} parent=5 // pred_check_branch
        %240 = sbr.rel (%p237) target = $region36
      $region35: #{tpu_custom_call.1} parent=5 // pred_region
        %s241 = ssub.s32 %s19, 1
        %s242 = sand.u32 %s53, 1
        %s243 = scalar_lea.sflag [#allocation6], %s242
        %s244 = sand.u32 %s53, 1
        %s245 = smul.addr %s244, 256
        %s246 = scalar_lea.vmem [#allocation5], %s245
        // Predicated region
        $region37: #{tpu_custom_call.1} parent=35 // pred_check
          %p247 = pneg %p66
        $region38: #{tpu_custom_call.1} parent=35 // pred_check_branch
          %249 = sbr.rel (%p247) target = $region40
        $region39: #{tpu_custom_call.1} parent=35 // pred_region
          %250 = dma.done %s243, 4096
        $region40: #{tpu_custom_call.1} parent=35 // pred_fallthru
          _
        %s251 = sand.u32 %s81, 1
        %s252 = scalar_lea.sflag [#allocation9], %s251
        %s253 = sand.u32 %s81, 1
        %s254 = smul.addr %s253, 256
        %s255 = scalar_lea.vmem [#allocation8], %s254
        // Predicated region
        $region41: #{tpu_custom_call.1} parent=35 // pred_check
          %p256 = pneg %p94
        $region42: #{tpu_custom_call.1} parent=35 // pred_check_branch
          %258 = sbr.rel (%p256) target = $region44
        $region43: #{tpu_custom_call.1} parent=35 // pred_region
          %259 = dma.done %s252, 4096
        $region44: #{tpu_custom_call.1} parent=35 // pred_fallthru
          _
        %s260 = sand.u32 %s53, 1
        %s261 = scalar_lea.sflag [#allocation6], %s260
        %s262 = sand.u32 %s53, 1
        %s263 = smul.addr %s262, 256
        %s264 = scalar_lea.vmem [#allocation5], %s263
        %p265 = pneg %p66
        %p266 = pneg %p63
        %s267 = sand.u32 %s81, 1
        %s268 = scalar_lea.sflag [#allocation9], %s267
        %s269 = sand.u32 %s81, 1
        %s270 = smul.addr %s269, 256
        %s271 = scalar_lea.vmem [#allocation8], %s270
        %p272 = pneg %p94
        %p273 = pneg %p91
        %p274 = pneg %p115
        %p275 = pneg %p112
        %p276 = pneg %p136
        %p277 = pneg %p133
        %p278 = pneg %p164
        %p279 = pneg %p161
        %s280 = sand.u32 %s151, 1
        %s281 = scalar_lea.sflag [#allocation7], %s280
        %s282 = sand.u32 %s151, 1
        %s283 = smul.addr %s282, 256
        %s284 = scalar_lea.vmem [#allocation10], %s283
        %s285 = smul.u32 32, %s30
        %s286 = smul.u32 32, %s31
        %s287 = smul.u32 32, %s30
        %p289 = scmp.eq.s32.totalorder %s31, 0
        // Predicated region
        $region45: #{tpu_custom_call.1} parent=35 // pred_check
          %p290 = pneg %p289
        $region46: #{tpu_custom_call.1} parent=35 // pred_check_branch
          %292 = sbr.rel (%p290) target = $region48
        $region47: #{tpu_custom_call.1} parent=35 // pred_region
          %vm293 = vcmask 7168
          %294 = vst.msk [vmem:[#allocation3] sm:$0xff] %vm293, 0.0
          %295 = vst.msk [vmem:[#allocation3 + $0x8] sm:$0xff] %vm293, 0.0
          %296 = vst.msk [vmem:[#allocation3 + $0x10] sm:$0xff] %vm293, 0.0
          %297 = vst.msk [vmem:[#allocation3 + $0x18] sm:$0xff] %vm293, 0.0
          %298 = vst.msk [vmem:[#allocation3 + $0x20] sm:$0xff] %vm293, 0.0
          %299 = vst.msk [vmem:[#allocation3 + $0x28] sm:$0xff] %vm293, 0.0
          %300 = vst.msk [vmem:[#allocation3 + $0x30] sm:$0xff] %vm293, 0.0
          %301 = vst.msk [vmem:[#allocation3 + $0x38] sm:$0xff] %vm293, 0.0
          %302 = vst.msk [vmem:[#allocation3 + $0x40] sm:$0xff] %vm293, 0.0
          %303 = vst.msk [vmem:[#allocation3 + $0x48] sm:$0xff] %vm293, 0.0
          %304 = vst.msk [vmem:[#allocation3 + $0x50] sm:$0xff] %vm293, 0.0
          %305 = vst.msk [vmem:[#allocation3 + $0x58] sm:$0xff] %vm293, 0.0
          %306 = vst.msk [vmem:[#allocation3 + $0x60] sm:$0xff] %vm293, 0.0
          %307 = vst.msk [vmem:[#allocation3 + $0x68] sm:$0xff] %vm293, 0.0
          %308 = vst.msk [vmem:[#allocation3 + $0x70] sm:$0xff] %vm293, 0.0
          %309 = vst.msk [vmem:[#allocation3 + $0x78] sm:$0xff] %vm293, 0.0
          %310 = vst.msk [vmem:[#allocation3 + $0x80] sm:$0xff] %vm293, 0.0
          %311 = vst.msk [vmem:[#allocation3 + $0x88] sm:$0xff] %vm293, 0.0
          %312 = vst.msk [vmem:[#allocation3 + $0x90] sm:$0xff] %vm293, 0.0
          %313 = vst.msk [vmem:[#allocation3 + $0x98] sm:$0xff] %vm293, 0.0
          %314 = vst.msk [vmem:[#allocation3 + $0xa0] sm:$0xff] %vm293, 0.0
          %315 = vst.msk [vmem:[#allocation3 + $0xa8] sm:$0xff] %vm293, 0.0
          %316 = vst.msk [vmem:[#allocation3 + $0xb0] sm:$0xff] %vm293, 0.0
          %317 = vst.msk [vmem:[#allocation3 + $0xb8] sm:$0xff] %vm293, 0.0
          %318 = vst.msk [vmem:[#allocation3 + $0xc0] sm:$0xff] %vm293, 0.0
          %319 = vst.msk [vmem:[#allocation3 + $0xc8] sm:$0xff] %vm293, 0.0
          %320 = vst.msk [vmem:[#allocation3 + $0xd0] sm:$0xff] %vm293, 0.0
          %321 = vst.msk [vmem:[#allocation3 + $0xd8] sm:$0xff] %vm293, 0.0
          %322 = vst.msk [vmem:[#allocation3 + $0xe0] sm:$0xff] %vm293, 0.0
          %323 = vst.msk [vmem:[#allocation3 + $0xe8] sm:$0xff] %vm293, 0.0
          %324 = vst.msk [vmem:[#allocation3 + $0xf0] sm:$0xff] %vm293, 0.0
          %325 = vst.msk [vmem:[#allocation3 + $0xf8] sm:$0xff] %vm293, 0.0
          %326 = vst [vmem:[#allocation4] sm:$0xff] 0.0
          %327 = vst [vmem:[#allocation4 + $0x8] sm:$0xff] 0.0
          %328 = vst [vmem:[#allocation4 + $0x10] sm:$0xff] 0.0
          %329 = vst [vmem:[#allocation4 + $0x18] sm:$0xff] 0.0
          %330 = vst [vmem:[#allocation4 + $0x20] sm:$0xff] 0.0
          %331 = vst [vmem:[#allocation4 + $0x28] sm:$0xff] 0.0
          %332 = vst [vmem:[#allocation4 + $0x30] sm:$0xff] 0.0
          %333 = vst [vmem:[#allocation4 + $0x38] sm:$0xff] 0.0
          %334 = vst [vmem:[#allocation4 + $0x40] sm:$0xff] 0.0
          %335 = vst [vmem:[#allocation4 + $0x48] sm:$0xff] 0.0
          %336 = vst [vmem:[#allocation4 + $0x50] sm:$0xff] 0.0
          %337 = vst [vmem:[#allocation4 + $0x58] sm:$0xff] 0.0
          %338 = vst [vmem:[#allocation4 + $0x60] sm:$0xff] 0.0
          %339 = vst [vmem:[#allocation4 + $0x68] sm:$0xff] 0.0
          %340 = vst [vmem:[#allocation4 + $0x70] sm:$0xff] 0.0
          %341 = vst [vmem:[#allocation4 + $0x78] sm:$0xff] 0.0
          %342 = vst [vmem:[#allocation4 + $0x80] sm:$0xff] 0.0
          %343 = vst [vmem:[#allocation4 + $0x88] sm:$0xff] 0.0
          %344 = vst [vmem:[#allocation4 + $0x90] sm:$0xff] 0.0
          %345 = vst [vmem:[#allocation4 + $0x98] sm:$0xff] 0.0
          %346 = vst [vmem:[#allocation4 + $0xa0] sm:$0xff] 0.0
          %347 = vst [vmem:[#allocation4 + $0xa8] sm:$0xff] 0.0
          %348 = vst [vmem:[#allocation4 + $0xb0] sm:$0xff] 0.0
          %349 = vst [vmem:[#allocation4 + $0xb8] sm:$0xff] 0.0
          %350 = vst [vmem:[#allocation4 + $0xc0] sm:$0xff] 0.0
          %351 = vst [vmem:[#allocation4 + $0xc8] sm:$0xff] 0.0
          %352 = vst [vmem:[#allocation4 + $0xd0] sm:$0xff] 0.0
          %353 = vst [vmem:[#allocation4 + $0xd8] sm:$0xff] 0.0
          %354 = vst [vmem:[#allocation4 + $0xe0] sm:$0xff] 0.0
          %355 = vst [vmem:[#allocation4 + $0xe8] sm:$0xff] 0.0
          %356 = vst [vmem:[#allocation4 + $0xf0] sm:$0xff] 0.0
          %357 = vst [vmem:[#allocation4 + $0xf8] sm:$0xff] 0.0
          %v358 = vld [vmem:[%s246] sm:$0xff]
          %v359 = vld [vmem:[%s246 + $0x8] sm:$0xff]
          %v360 = vld [vmem:[%s246 + $0x10] sm:$0xff]
          %v361 = vld [vmem:[%s246 + $0x18] sm:$0xff]
          %v362 = vld [vmem:[%s246 + $0x20] sm:$0xff]
          %v363 = vld [vmem:[%s246 + $0x28] sm:$0xff]
          %v364 = vld [vmem:[%s246 + $0x30] sm:$0xff]
          %v365 = vld [vmem:[%s246 + $0x38] sm:$0xff]
          %v366 = vld [vmem:[%s246 + $0x40] sm:$0xff]
          %v367 = vld [vmem:[%s246 + $0x48] sm:$0xff]
          %v368 = vld [vmem:[%s246 + $0x50] sm:$0xff]
          %v369 = vld [vmem:[%s246 + $0x58] sm:$0xff]
          %v370 = vld [vmem:[%s246 + $0x60] sm:$0xff]
          %v371 = vld [vmem:[%s246 + $0x68] sm:$0xff]
          %v372 = vld [vmem:[%s246 + $0x70] sm:$0xff]
          %v373 = vld [vmem:[%s246 + $0x78] sm:$0xff]
          %v374 = vld [vmem:[%s246 + $0x80] sm:$0xff]
          %v375 = vld [vmem:[%s246 + $0x88] sm:$0xff]
          %v376 = vld [vmem:[%s246 + $0x90] sm:$0xff]
          %v377 = vld [vmem:[%s246 + $0x98] sm:$0xff]
          %v378 = vld [vmem:[%s246 + $0xa0] sm:$0xff]
          %v379 = vld [vmem:[%s246 + $0xa8] sm:$0xff]
          %v380 = vld [vmem:[%s246 + $0xb0] sm:$0xff]
          %v381 = vld [vmem:[%s246 + $0xb8] sm:$0xff]
          %v382 = vld [vmem:[%s246 + $0xc0] sm:$0xff]
          %v383 = vld [vmem:[%s246 + $0xc8] sm:$0xff]
          %v384 = vld [vmem:[%s246 + $0xd0] sm:$0xff]
          %v385 = vld [vmem:[%s246 + $0xd8] sm:$0xff]
          %v386 = vld [vmem:[%s246 + $0xe0] sm:$0xff]
          %v387 = vld [vmem:[%s246 + $0xe8] sm:$0xff]
          %v388 = vld [vmem:[%s246 + $0xf0] sm:$0xff]
          %v389 = vld [vmem:[%s246 + $0xf8] sm:$0xff]
          %v390 = vmul.f32 %v358, %v358
          %v391 = vmul.f32 %v359, %v359
          %v392 = vmul.f32 %v360, %v360
          %v393 = vmul.f32 %v361, %v361
          %v394 = vmul.f32 %v362, %v362
          %v395 = vmul.f32 %v363, %v363
          %v396 = vmul.f32 %v364, %v364
          %v397 = vmul.f32 %v365, %v365
          %v398 = vmul.f32 %v366, %v366
          %v399 = vmul.f32 %v367, %v367
          %v400 = vmul.f32 %v368, %v368
          %v401 = vmul.f32 %v369, %v369
          %v402 = vmul.f32 %v370, %v370
          %v403 = vmul.f32 %v371, %v371
          %v404 = vmul.f32 %v372, %v372
          %v405 = vmul.f32 %v373, %v373
          %v406 = vmul.f32 %v374, %v374
          %v407 = vmul.f32 %v375, %v375
          %v408 = vmul.f32 %v376, %v376
          %v409 = vmul.f32 %v377, %v377
          %v410 = vmul.f32 %v378, %v378
          %v411 = vmul.f32 %v379, %v379
          %v412 = vmul.f32 %v380, %v380
          %v413 = vmul.f32 %v381, %v381
          %v414 = vmul.f32 %v382, %v382
          %v415 = vmul.f32 %v383, %v383
          %v416 = vmul.f32 %v384, %v384
          %v417 = vmul.f32 %v385, %v385
          %v418 = vmul.f32 %v386, %v386
          %v419 = vmul.f32 %v387, %v387
          %v420 = vmul.f32 %v388, %v388
          %v421 = vmul.f32 %v389, %v389
          %422 = vadd.xlane.f32.xlu0 %v390
          %v423 = vpop.xlane.xlu0 %422
          %424 = vadd.xlane.f32.xlu0 %v391
          %v425 = vpop.xlane.xlu0 %424
          %426 = vadd.xlane.f32.xlu0 %v392
          %v427 = vpop.xlane.xlu0 %426
          %428 = vadd.xlane.f32.xlu0 %v393
          %v429 = vpop.xlane.xlu0 %428
          %430 = vadd.xlane.f32.xlu0 %v394
          %v431 = vpop.xlane.xlu0 %430
          %432 = vadd.xlane.f32.xlu0 %v395
          %v433 = vpop.xlane.xlu0 %432
          %434 = vadd.xlane.f32.xlu0 %v396
          %v435 = vpop.xlane.xlu0 %434
          %436 = vadd.xlane.f32.xlu0 %v397
          %v437 = vpop.xlane.xlu0 %436
          %438 = vadd.xlane.f32.xlu0 %v398
          %v439 = vpop.xlane.xlu0 %438
          %440 = vadd.xlane.f32.xlu0 %v399
          %v441 = vpop.xlane.xlu0 %440
          %442 = vadd.xlane.f32.xlu0 %v400
          %v443 = vpop.xlane.xlu0 %442
          %444 = vadd.xlane.f32.xlu0 %v401
          %v445 = vpop.xlane.xlu0 %444
          %446 = vadd.xlane.f32.xlu0 %v402
          %v447 = vpop.xlane.xlu0 %446
          %448 = vadd.xlane.f32.xlu0 %v403
          %v449 = vpop.xlane.xlu0 %448
          %450 = vadd.xlane.f32.xlu0 %v404
          %v451 = vpop.xlane.xlu0 %450
          %452 = vadd.xlane.f32.xlu0 %v405
          %v453 = vpop.xlane.xlu0 %452
          %454 = vadd.xlane.f32.xlu0 %v406
          %v455 = vpop.xlane.xlu0 %454
          %456 = vadd.xlane.f32.xlu0 %v407
          %v457 = vpop.xlane.xlu0 %456
          %458 = vadd.xlane.f32.xlu0 %v408
          %v459 = vpop.xlane.xlu0 %458
          %460 = vadd.xlane.f32.xlu0 %v409
          %v461 = vpop.xlane.xlu0 %460
          %462 = vadd.xlane.f32.xlu0 %v410
          %v463 = vpop.xlane.xlu0 %462
          %464 = vadd.xlane.f32.xlu0 %v411
          %v465 = vpop.xlane.xlu0 %464
          %466 = vadd.xlane.f32.xlu0 %v412
          %v467 = vpop.xlane.xlu0 %466
          %468 = vadd.xlane.f32.xlu0 %v413
          %v469 = vpop.xlane.xlu0 %468
          %470 = vadd.xlane.f32.xlu0 %v414
          %v471 = vpop.xlane.xlu0 %470
          %472 = vadd.xlane.f32.xlu0 %v415
          %v473 = vpop.xlane.xlu0 %472
          %474 = vadd.xlane.f32.xlu0 %v416
          %v475 = vpop.xlane.xlu0 %474
          %476 = vadd.xlane.f32.xlu0 %v417
          %v477 = vpop.xlane.xlu0 %476
          %478 = vadd.xlane.f32.xlu0 %v418
          %v479 = vpop.xlane.xlu0 %478
          %480 = vadd.xlane.f32.xlu0 %v419
          %v481 = vpop.xlane.xlu0 %480
          %482 = vadd.xlane.f32.xlu0 %v420
          %v483 = vpop.xlane.xlu0 %482
          %484 = vadd.xlane.f32.xlu0 %v421
          %v485 = vpop.xlane.xlu0 %484
          %v486 = vmax.f32 %v423, 1e-24
          %v487 = vmax.f32 %v425, 1e-24
          %v488 = vmax.f32 %v427, 1e-24
          %v489 = vmax.f32 %v429, 1e-24
          %v490 = vmax.f32 %v431, 1e-24
          %v491 = vmax.f32 %v433, 1e-24
          %v492 = vmax.f32 %v435, 1e-24
          %v493 = vmax.f32 %v437, 1e-24
          %v494 = vmax.f32 %v439, 1e-24
          %v495 = vmax.f32 %v441, 1e-24
          %v496 = vmax.f32 %v443, 1e-24
          %v497 = vmax.f32 %v445, 1e-24
          %v498 = vmax.f32 %v447, 1e-24
          %v499 = vmax.f32 %v449, 1e-24
          %v500 = vmax.f32 %v451, 1e-24
          %v501 = vmax.f32 %v453, 1e-24
          %v502 = vmax.f32 %v455, 1e-24
          %v503 = vmax.f32 %v457, 1e-24
          %v504 = vmax.f32 %v459, 1e-24
          %v505 = vmax.f32 %v461, 1e-24
          %v506 = vmax.f32 %v463, 1e-24
          %v507 = vmax.f32 %v465, 1e-24
          %v508 = vmax.f32 %v467, 1e-24
          %v509 = vmax.f32 %v469, 1e-24
          %v510 = vmax.f32 %v471, 1e-24
          %v511 = vmax.f32 %v473, 1e-24
          %v512 = vmax.f32 %v475, 1e-24
          %v513 = vmax.f32 %v477, 1e-24
          %v514 = vmax.f32 %v479, 1e-24
          %v515 = vmax.f32 %v481, 1e-24
          %v516 = vmax.f32 %v483, 1e-24
          %v517 = vmax.f32 %v485, 1e-24
          %v518 = vrsqrt.pop %v486
          %v519 = vrsqrt.pop %v487
          %v520 = vrsqrt.pop %v488
          %v521 = vrsqrt.pop %v489
          %v522 = vrsqrt.pop %v490
          %v523 = vrsqrt.pop %v491
          %v524 = vrsqrt.pop %v492
          %v525 = vrsqrt.pop %v493
          %v526 = vrsqrt.pop %v494
          %v527 = vrsqrt.pop %v495
          %v528 = vrsqrt.pop %v496
          %v529 = vrsqrt.pop %v497
          %v530 = vrsqrt.pop %v498
          %v531 = vrsqrt.pop %v499
          %v532 = vrsqrt.pop %v500
          %v533 = vrsqrt.pop %v501
          %v534 = vrsqrt.pop %v502
          %v535 = vrsqrt.pop %v503
          %v536 = vrsqrt.pop %v504
          %v537 = vrsqrt.pop %v505
          %v538 = vrsqrt.pop %v506
          %v539 = vrsqrt.pop %v507
          %v540 = vrsqrt.pop %v508
          %v541 = vrsqrt.pop %v509
          %v542 = vrsqrt.pop %v510
          %v543 = vrsqrt.pop %v511
          %v544 = vrsqrt.pop %v512
          %v545 = vrsqrt.pop %v513
          %v546 = vrsqrt.pop %v514
          %v547 = vrsqrt.pop %v515
          %v548 = vrsqrt.pop %v516
          %v549 = vrsqrt.pop %v517
          %v550 = vmul.f32 %v358, %v518
          %v551 = vmul.f32 %v359, %v519
          %v552 = vmul.f32 %v360, %v520
          %v553 = vmul.f32 %v361, %v521
          %v554 = vmul.f32 %v362, %v522
          %v555 = vmul.f32 %v363, %v523
          %v556 = vmul.f32 %v364, %v524
          %v557 = vmul.f32 %v365, %v525
          %v558 = vmul.f32 %v366, %v526
          %v559 = vmul.f32 %v367, %v527
          %v560 = vmul.f32 %v368, %v528
          %v561 = vmul.f32 %v369, %v529
          %v562 = vmul.f32 %v370, %v530
          %v563 = vmul.f32 %v371, %v531
          %v564 = vmul.f32 %v372, %v532
          %v565 = vmul.f32 %v373, %v533
          %v566 = vmul.f32 %v374, %v534
          %v567 = vmul.f32 %v375, %v535
          %v568 = vmul.f32 %v376, %v536
          %v569 = vmul.f32 %v377, %v537
          %v570 = vmul.f32 %v378, %v538
          %v571 = vmul.f32 %v379, %v539
          %v572 = vmul.f32 %v380, %v540
          %v573 = vmul.f32 %v381, %v541
          %v574 = vmul.f32 %v382, %v542
          %v575 = vmul.f32 %v383, %v543
          %v576 = vmul.f32 %v384, %v544
          %v577 = vmul.f32 %v385, %v545
          %v578 = vmul.f32 %v386, %v546
          %v579 = vmul.f32 %v387, %v547
          %v580 = vmul.f32 %v388, %v548
          %v581 = vmul.f32 %v389, %v549
          %v582 = vpack.c.bf16 %v551, %v550
          %v583 = vpack.c.bf16 %v553, %v552
          %v584 = vpack.c.bf16 %v555, %v554
          %v585 = vpack.c.bf16 %v557, %v556
          %v586 = vpack.c.bf16 %v559, %v558
          %v587 = vpack.c.bf16 %v561, %v560
          %v588 = vpack.c.bf16 %v563, %v562
          %v589 = vpack.c.bf16 %v565, %v564
          %v590 = vpack.c.bf16 %v567, %v566
          %v591 = vpack.c.bf16 %v569, %v568
          %v592 = vpack.c.bf16 %v571, %v570
          %v593 = vpack.c.bf16 %v573, %v572
          %v594 = vpack.c.bf16 %v575, %v574
          %v595 = vpack.c.bf16 %v577, %v576
          %v596 = vpack.c.bf16 %v579, %v578
          %v597 = vpack.c.bf16 %v581, %v580
          %598 = vst [vmem:[#allocation2] sm:$0xff] %v582
          %599 = vst [vmem:[#allocation2 + $0x8] sm:$0xff] %v583
          %600 = vst [vmem:[#allocation2 + $0x10] sm:$0xff] %v584
          %601 = vst [vmem:[#allocation2 + $0x18] sm:$0xff] %v585
          %602 = vst [vmem:[#allocation2 + $0x20] sm:$0xff] %v586
          %603 = vst [vmem:[#allocation2 + $0x28] sm:$0xff] %v587
          %604 = vst [vmem:[#allocation2 + $0x30] sm:$0xff] %v588
          %605 = vst [vmem:[#allocation2 + $0x38] sm:$0xff] %v589
          %606 = vst [vmem:[#allocation2 + $0x40] sm:$0xff] %v590
          %607 = vst [vmem:[#allocation2 + $0x48] sm:$0xff] %v591
          %608 = vst [vmem:[#allocation2 + $0x50] sm:$0xff] %v592
          %609 = vst [vmem:[#allocation2 + $0x58] sm:$0xff] %v593
          %610 = vst [vmem:[#allocation2 + $0x60] sm:$0xff] %v594
          %611 = vst [vmem:[#allocation2 + $0x68] sm:$0xff] %v595
          %612 = vst [vmem:[#allocation2 + $0x70] sm:$0xff] %v596
          %613 = vst [vmem:[#allocation2 + $0x78] sm:$0xff] %v597
        $region48: #{tpu_custom_call.1} parent=35 // pred_fallthru
          _
        %v614 = vld [vmem:[%s255] sm:$0xff]
        %v615 = vld [vmem:[%s255 + $0x8] sm:$0xff]
        %v616 = vld [vmem:[%s255 + $0x10] sm:$0xff]
        %v617 = vld [vmem:[%s255 + $0x18] sm:$0xff]
        %v618 = vld [vmem:[%s255 + $0x20] sm:$0xff]
        %v619 = vld [vmem:[%s255 + $0x28] sm:$0xff]
        %v620 = vld [vmem:[%s255 + $0x30] sm:$0xff]
        %v621 = vld [vmem:[%s255 + $0x38] sm:$0xff]
        %v622 = vld [vmem:[%s255 + $0x40] sm:$0xff]
        %v623 = vld [vmem:[%s255 + $0x48] sm:$0xff]
        %v624 = vld [vmem:[%s255 + $0x50] sm:$0xff]
        %v625 = vld [vmem:[%s255 + $0x58] sm:$0xff]
        %v626 = vld [vmem:[%s255 + $0x60] sm:$0xff]
        %v627 = vld [vmem:[%s255 + $0x68] sm:$0xff]
        %v628 = vld [vmem:[%s255 + $0x70] sm:$0xff]
        %v629 = vld [vmem:[%s255 + $0x78] sm:$0xff]
        %v630 = vld [vmem:[%s255 + $0x80] sm:$0xff]
        %v631 = vld [vmem:[%s255 + $0x88] sm:$0xff]
        %v632 = vld [vmem:[%s255 + $0x90] sm:$0xff]
        %v633 = vld [vmem:[%s255 + $0x98] sm:$0xff]
        %v634 = vld [vmem:[%s255 + $0xa0] sm:$0xff]
        %v635 = vld [vmem:[%s255 + $0xa8] sm:$0xff]
        %v636 = vld [vmem:[%s255 + $0xb0] sm:$0xff]
        %v637 = vld [vmem:[%s255 + $0xb8] sm:$0xff]
        %v638 = vld [vmem:[%s255 + $0xc0] sm:$0xff]
        %v639 = vld [vmem:[%s255 + $0xc8] sm:$0xff]
        %v640 = vld [vmem:[%s255 + $0xd0] sm:$0xff]
        %v641 = vld [vmem:[%s255 + $0xd8] sm:$0xff]
        %v642 = vld [vmem:[%s255 + $0xe0] sm:$0xff]
        %v643 = vld [vmem:[%s255 + $0xe8] sm:$0xff]
        %v644 = vld [vmem:[%s255 + $0xf0] sm:$0xff]
        %v645 = vld [vmem:[%s255 + $0xf8] sm:$0xff]
        %v646 = vmul.f32 %v614, %v614
        %v647 = vmul.f32 %v615, %v615
        %v648 = vmul.f32 %v616, %v616
        %v649 = vmul.f32 %v617, %v617
        %v650 = vmul.f32 %v618, %v618
        %v651 = vmul.f32 %v619, %v619
        %v652 = vmul.f32 %v620, %v620
        %v653 = vmul.f32 %v621, %v621
        %v654 = vmul.f32 %v622, %v622
        %v655 = vmul.f32 %v623, %v623
        %v656 = vmul.f32 %v624, %v624
        %v657 = vmul.f32 %v625, %v625
        %v658 = vmul.f32 %v626, %v626
        %v659 = vmul.f32 %v627, %v627
        %v660 = vmul.f32 %v628, %v628
        %v661 = vmul.f32 %v629, %v629
        %v662 = vmul.f32 %v630, %v630
        %v663 = vmul.f32 %v631, %v631
        %v664 = vmul.f32 %v632, %v632
        %v665 = vmul.f32 %v633, %v633
        %v666 = vmul.f32 %v634, %v634
        %v667 = vmul.f32 %v635, %v635
        %v668 = vmul.f32 %v636, %v636
        %v669 = vmul.f32 %v637, %v637
        %v670 = vmul.f32 %v638, %v638
        %v671 = vmul.f32 %v639, %v639
        %v672 = vmul.f32 %v640, %v640
        %v673 = vmul.f32 %v641, %v641
        %v674 = vmul.f32 %v642, %v642
        %v675 = vmul.f32 %v643, %v643
        %v676 = vmul.f32 %v644, %v644
        %v677 = vmul.f32 %v645, %v645
        %678 = vadd.xlane.f32.xlu0 %v646
        %v679 = vpop.xlane.xlu0 %678
        %680 = vadd.xlane.f32.xlu0 %v647
        %v681 = vpop.xlane.xlu0 %680
        %682 = vadd.xlane.f32.xlu0 %v648
        %v683 = vpop.xlane.xlu0 %682
        %684 = vadd.xlane.f32.xlu0 %v649
        %v685 = vpop.xlane.xlu0 %684
        %686 = vadd.xlane.f32.xlu0 %v650
        %v687 = vpop.xlane.xlu0 %686
        %688 = vadd.xlane.f32.xlu0 %v651
        %v689 = vpop.xlane.xlu0 %688
        %690 = vadd.xlane.f32.xlu0 %v652
        %v691 = vpop.xlane.xlu0 %690
        %692 = vadd.xlane.f32.xlu0 %v653
        %v693 = vpop.xlane.xlu0 %692
        %694 = vadd.xlane.f32.xlu0 %v654
        %v695 = vpop.xlane.xlu0 %694
        %696 = vadd.xlane.f32.xlu0 %v655
        %v697 = vpop.xlane.xlu0 %696
        %698 = vadd.xlane.f32.xlu0 %v656
        %v699 = vpop.xlane.xlu0 %698
        %700 = vadd.xlane.f32.xlu0 %v657
        %v701 = vpop.xlane.xlu0 %700
        %702 = vadd.xlane.f32.xlu0 %v658
        %v703 = vpop.xlane.xlu0 %702
        %704 = vadd.xlane.f32.xlu0 %v659
        %v705 = vpop.xlane.xlu0 %704
        %706 = vadd.xlane.f32.xlu0 %v660
        %v707 = vpop.xlane.xlu0 %706
        %708 = vadd.xlane.f32.xlu0 %v661
        %v709 = vpop.xlane.xlu0 %708
        %710 = vadd.xlane.f32.xlu0 %v662
        %v711 = vpop.xlane.xlu0 %710
        %712 = vadd.xlane.f32.xlu0 %v663
        %v713 = vpop.xlane.xlu0 %712
        %714 = vadd.xlane.f32.xlu0 %v664
        %v715 = vpop.xlane.xlu0 %714
        %716 = vadd.xlane.f32.xlu0 %v665
        %v717 = vpop.xlane.xlu0 %716
        %718 = vadd.xlane.f32.xlu0 %v666
        %v719 = vpop.xlane.xlu0 %718
        %720 = vadd.xlane.f32.xlu0 %v667
        %v721 = vpop.xlane.xlu0 %720
        %722 = vadd.xlane.f32.xlu0 %v668
        %v723 = vpop.xlane.xlu0 %722
        %724 = vadd.xlane.f32.xlu0 %v669
        %v725 = vpop.xlane.xlu0 %724
        %726 = vadd.xlane.f32.xlu0 %v670
        %v727 = vpop.xlane.xlu0 %726
        %728 = vadd.xlane.f32.xlu0 %v671
        %v729 = vpop.xlane.xlu0 %728
        %730 = vadd.xlane.f32.xlu0 %v672
        %v731 = vpop.xlane.xlu0 %730
        %732 = vadd.xlane.f32.xlu0 %v673
        %v733 = vpop.xlane.xlu0 %732
        %734 = vadd.xlane.f32.xlu0 %v674
        %v735 = vpop.xlane.xlu0 %734
        %736 = vadd.xlane.f32.xlu0 %v675
        %v737 = vpop.xlane.xlu0 %736
        %738 = vadd.xlane.f32.xlu0 %v676
        %v739 = vpop.xlane.xlu0 %738
        %740 = vadd.xlane.f32.xlu0 %v677
        %v741 = vpop.xlane.xlu0 %740
        %v742 = vmax.f32 %v679, 1e-24
        %v743 = vmax.f32 %v681, 1e-24
        %v744 = vmax.f32 %v683, 1e-24
        %v745 = vmax.f32 %v685, 1e-24
        %v746 = vmax.f32 %v687, 1e-24
        %v747 = vmax.f32 %v689, 1e-24
        %v748 = vmax.f32 %v691, 1e-24
        %v749 = vmax.f32 %v693, 1e-24
        %v750 = vmax.f32 %v695, 1e-24
        %v751 = vmax.f32 %v697, 1e-24
        %v752 = vmax.f32 %v699, 1e-24
        %v753 = vmax.f32 %v701, 1e-24
        %v754 = vmax.f32 %v703, 1e-24
        %v755 = vmax.f32 %v705, 1e-24
        %v756 = vmax.f32 %v707, 1e-24
        %v757 = vmax.f32 %v709, 1e-24
        %v758 = vmax.f32 %v711, 1e-24
        %v759 = vmax.f32 %v713, 1e-24
        %v760 = vmax.f32 %v715, 1e-24
        %v761 = vmax.f32 %v717, 1e-24
        %v762 = vmax.f32 %v719, 1e-24
        %v763 = vmax.f32 %v721, 1e-24
        %v764 = vmax.f32 %v723, 1e-24
        %v765 = vmax.f32 %v725, 1e-24
        %v766 = vmax.f32 %v727, 1e-24
        %v767 = vmax.f32 %v729, 1e-24
        %v768 = vmax.f32 %v731, 1e-24
        %v769 = vmax.f32 %v733, 1e-24
        %v770 = vmax.f32 %v735, 1e-24
        %v771 = vmax.f32 %v737, 1e-24
        %v772 = vmax.f32 %v739, 1e-24
        %v773 = vmax.f32 %v741, 1e-24
        %v774 = vrsqrt.pop %v742
        %v775 = vrsqrt.pop %v743
        %v776 = vrsqrt.pop %v744
        %v777 = vrsqrt.pop %v745
        %v778 = vrsqrt.pop %v746
        %v779 = vrsqrt.pop %v747
        %v780 = vrsqrt.pop %v748
        %v781 = vrsqrt.pop %v749
        %v782 = vrsqrt.pop %v750
        %v783 = vrsqrt.pop %v751
        %v784 = vrsqrt.pop %v752
        %v785 = vrsqrt.pop %v753
        %v786 = vrsqrt.pop %v754
        %v787 = vrsqrt.pop %v755
        %v788 = vrsqrt.pop %v756
        %v789 = vrsqrt.pop %v757
        %v790 = vrsqrt.pop %v758
        %v791 = vrsqrt.pop %v759
        %v792 = vrsqrt.pop %v760
        %v793 = vrsqrt.pop %v761
        %v794 = vrsqrt.pop %v762
        %v795 = vrsqrt.pop %v763
        %v796 = vrsqrt.pop %v764
        %v797 = vrsqrt.pop %v765
        %v798 = vrsqrt.pop %v766
        %v799 = vrsqrt.pop %v767
        %v800 = vrsqrt.pop %v768
        %v801 = vrsqrt.pop %v769
        %v802 = vrsqrt.pop %v770
        %v803 = vrsqrt.pop %v771
        %v804 = vrsqrt.pop %v772
        %v805 = vrsqrt.pop %v773
        %v806 = vmul.f32 %v614, %v774
        %v807 = vmul.f32 %v615, %v775
        %v808 = vmul.f32 %v616, %v776
        %v809 = vmul.f32 %v617, %v777
        %v810 = vmul.f32 %v618, %v778
        %v811 = vmul.f32 %v619, %v779
        %v812 = vmul.f32 %v620, %v780
        %v813 = vmul.f32 %v621, %v781
        %v814 = vmul.f32 %v622, %v782
        %v815 = vmul.f32 %v623, %v783
        %v816 = vmul.f32 %v624, %v784
        %v817 = vmul.f32 %v625, %v785
        %v818 = vmul.f32 %v626, %v786
        %v819 = vmul.f32 %v627, %v787
        %v820 = vmul.f32 %v628, %v788
        %v821 = vmul.f32 %v629, %v789
        %v822 = vmul.f32 %v630, %v790
        %v823 = vmul.f32 %v631, %v791
        %v824 = vmul.f32 %v632, %v792
        %v825 = vmul.f32 %v633, %v793
        %v826 = vmul.f32 %v634, %v794
        %v827 = vmul.f32 %v635, %v795
        %v828 = vmul.f32 %v636, %v796
        %v829 = vmul.f32 %v637, %v797
        %v830 = vmul.f32 %v638, %v798
        %v831 = vmul.f32 %v639, %v799
        %v832 = vmul.f32 %v640, %v800
        %v833 = vmul.f32 %v641, %v801
        %v834 = vmul.f32 %v642, %v802
        %v835 = vmul.f32 %v643, %v803
        %v836 = vmul.f32 %v644, %v804
        %v837 = vmul.f32 %v645, %v805
        %v838 = vpack.c.bf16 %v807, %v806
        %v839 = vpack.c.bf16 %v809, %v808
        %v840 = vpack.c.bf16 %v811, %v810
        %v841 = vpack.c.bf16 %v813, %v812
        %v842 = vpack.c.bf16 %v815, %v814
        %v843 = vpack.c.bf16 %v817, %v816
        %v844 = vpack.c.bf16 %v819, %v818
        %v845 = vpack.c.bf16 %v821, %v820
        %v846 = vpack.c.bf16 %v823, %v822
        %v847 = vpack.c.bf16 %v825, %v824
        %v848 = vpack.c.bf16 %v827, %v826
        %v849 = vpack.c.bf16 %v829, %v828
        %v850 = vpack.c.bf16 %v831, %v830
        %v851 = vpack.c.bf16 %v833, %v832
        %v852 = vpack.c.bf16 %v835, %v834
        %v853 = vpack.c.bf16 %v837, %v836
        %v854 = vld [vmem:[#allocation2] sm:$0xff]
        %v855 = vld [vmem:[#allocation2 + $0x8] sm:$0xff]
        %v856 = vld [vmem:[#allocation2 + $0x10] sm:$0xff]
        %v857 = vld [vmem:[#allocation2 + $0x18] sm:$0xff]
        %v858 = vld [vmem:[#allocation2 + $0x20] sm:$0xff]
        %v859 = vld [vmem:[#allocation2 + $0x28] sm:$0xff]
        %v860 = vld [vmem:[#allocation2 + $0x30] sm:$0xff]
        %v861 = vld [vmem:[#allocation2 + $0x38] sm:$0xff]
        %v862 = vld [vmem:[#allocation2 + $0x40] sm:$0xff]
        %v863 = vld [vmem:[#allocation2 + $0x48] sm:$0xff]
        %v864 = vld [vmem:[#allocation2 + $0x50] sm:$0xff]
        %v865 = vld [vmem:[#allocation2 + $0x58] sm:$0xff]
        %v866 = vld [vmem:[#allocation2 + $0x60] sm:$0xff]
        %v867 = vld [vmem:[#allocation2 + $0x68] sm:$0xff]
        %v868 = vld [vmem:[#allocation2 + $0x70] sm:$0xff]
        %v869 = vld [vmem:[#allocation2 + $0x78] sm:$0xff]
        %870 = vmatprep.subr.bf16.mxu0 0
        %871 = vmatpush1.bf16.xpose.msra.mxu0 %v838
        %872 = vmatprep.subr.bf16.mxu0 0
        %873 = vmatpush1.bf16.xpose.msra.mxu0 %v839
        %874 = vmatprep.subr.bf16.mxu0 0
        %875 = vmatpush1.bf16.xpose.msra.mxu0 %v840
        %876 = vmatprep.subr.bf16.mxu0 0
        %877 = vmatpush1.bf16.xpose.msra.mxu0 %v841
        %878 = vmatprep.subr.bf16.mxu0 0
        %879 = vmatpush1.bf16.xpose.msra.mxu0 %v842
        %880 = vmatprep.subr.bf16.mxu0 0
        %881 = vmatpush1.bf16.xpose.msra.mxu0 %v843
        %882 = vmatprep.subr.bf16.mxu0 0
        %883 = vmatpush1.bf16.xpose.msra.mxu0 %v844
        %884 = vmatprep.subr.bf16.mxu0 0
        %885 = vmatpush1.bf16.xpose.msra.mxu0 %v845
        %886 = vmatprep.subr.bf16.mxu0 0
        %887 = vmatpush1.bf16.xpose.msra.mxu0 %v846
        %888 = vmatprep.subr.bf16.mxu0 0
        %889 = vmatpush1.bf16.xpose.msra.mxu0 %v847
        %890 = vmatprep.subr.bf16.mxu0 0
        %891 = vmatpush1.bf16.xpose.msra.mxu0 %v848
        %892 = vmatprep.subr.bf16.mxu0 0
        %893 = vmatpush1.bf16.xpose.msra.mxu0 %v849
        %894 = vmatprep.subr.bf16.mxu0 0
        %895 = vmatpush1.bf16.xpose.msra.mxu0 %v850
        %896 = vmatprep.subr.bf16.mxu0 0
        %897 = vmatpush1.bf16.xpose.msra.mxu0 %v851
        %898 = vmatprep.subr.bf16.mxu0 0
        %899 = vmatpush1.bf16.xpose.msra.mxu0 %v852
        %900 = vmatprep.subr.bf16.mxu0 0
        %901 = vmatpush1.bf16.xpose.msra.mxu0 %v853
        %902 = vmatprep.mubr.bf16.mxu0 0
        %903 = vmatmul.mubr.bf16.gmra.mrb[0].mxu0 %v854
        %v904 = vpop.f32.mrb[0].mxu0
        %v905 = vadd.f32 0.0, %v904
        %v906 = vpop.f32.mrb[0].mxu0
        %v907 = vadd.f32 0.0, %v906
        %v908 = vpop.f32.mrb[0].mxu0
        %v909 = vadd.f32 0.0, %v908
        %v910 = vpop.f32.mrb[0].mxu0
        %v911 = vadd.f32 0.0, %v910
        %912 = vmatprep.mubr.bf16.mxu0 0
        %913 = vmatmul.mubr.bf16.gmra.mrb[0].mxu0 %v855
        %v914 = vpop.f32.mrb[0].mxu0
        %v915 = vadd.f32 0.0, %v914
        %v916 = vpop.f32.mrb[0].mxu0
        %v917 = vadd.f32 0.0, %v916
        %v918 = vpop.f32.mrb[0].mxu0
        %v919 = vadd.f32 0.0, %v918
        %v920 = vpop.f32.mrb[0].mxu0
        %v921 = vadd.f32 0.0, %v920
        %922 = vmatprep.mubr.bf16.mxu0 0
        %923 = vmatmul.mubr.bf16.gmra.mrb[0].mxu0 %v856
        %v924 = vpop.f32.mrb[0].mxu0
        %v925 = vadd.f32 0.0, %v924
        %v926 = vpop.f32.mrb[0].mxu0
        %v927 = vadd.f32 0.0, %v926
        %v928 = vpop.f32.mrb[0].mxu0
        %v929 = vadd.f32 0.0, %v928
        %v930 = vpop.f32.mrb[0].mxu0
        %v931 = vadd.f32 0.0, %v930
        %932 = vmatprep.mubr.bf16.mxu0 0
        %933 = vmatmul.mubr.bf16.gmra.mrb[0].mxu0 %v857
        %v934 = vpop.f32.mrb[0].mxu0
        %v935 = vadd.f32 0.0, %v934
        %v936 = vpop.f32.mrb[0].mxu0
        %v937 = vadd.f32 0.0, %v936
        %v938 = vpop.f32.mrb[0].mxu0
        %v939 = vadd.f32 0.0, %v938
        %v940 = vpop.f32.mrb[0].mxu0
        %v941 = vadd.f32 0.0, %v940
        %942 = vmatprep.mubr.bf16.mxu0 0
        %943 = vmatmul.mubr.bf16.gmra.mrb[0].mxu0 %v858
        %v944 = vpop.f32.mrb[0].mxu0
        %v945 = vadd.f32 0.0, %v944
        %v946 = vpop.f32.mrb[0].mxu0
        %v947 = vadd.f32 0.0, %v946
        %v948 = vpop.f32.mrb[0].mxu0
        %v949 = vadd.f32 0.0, %v948
        %v950 = vpop.f32.mrb[0].mxu0
        %v951 = vadd.f32 0.0, %v950
        %952 = vmatprep.mubr.bf16.mxu0 0
        %953 = vmatmul.mubr.bf16.gmra.mrb[0].mxu0 %v859
        %v954 = vpop.f32.mrb[0].mxu0
        %v955 = vadd.f32 0.0, %v954
        %v956 = vpop.f32.mrb[0].mxu0
        %v957 = vadd.f32 0.0, %v956
        %v958 = vpop.f32.mrb[0].mxu0
        %v959 = vadd.f32 0.0, %v958
        %v960 = vpop.f32.mrb[0].mxu0
        %v961 = vadd.f32 0.0, %v960
        %962 = vmatprep.mubr.bf16.mxu0 0
        %963 = vmatmul.mubr.bf16.gmra.mrb[0].mxu0 %v860
        %v964 = vpop.f32.mrb[0].mxu0
        %v965 = vadd.f32 0.0, %v964
        %v966 = vpop.f32.mrb[0].mxu0
        %v967 = vadd.f32 0.0, %v966
        %v968 = vpop.f32.mrb[0].mxu0
        %v969 = vadd.f32 0.0, %v968
        %v970 = vpop.f32.mrb[0].mxu0
        %v971 = vadd.f32 0.0, %v970
        %972 = vmatprep.mubr.bf16.mxu0 0
        %973 = vmatmul.mubr.bf16.gmra.mrb[0].mxu0 %v861
        %v974 = vpop.f32.mrb[0].mxu0
        %v975 = vadd.f32 0.0, %v974
        %v976 = vpop.f32.mrb[0].mxu0
        %v977 = vadd.f32 0.0, %v976
        %v978 = vpop.f32.mrb[0].mxu0
        %v979 = vadd.f32 0.0, %v978
        %v980 = vpop.f32.mrb[0].mxu0
        %v981 = vadd.f32 0.0, %v980
        %982 = vmatprep.mubr.bf16.mxu0 0
        %983 = vmatmul.mubr.bf16.gmra.mrb[0].mxu0 %v862
        %v984 = vpop.f32.mrb[0].mxu0
        %v985 = vadd.f32 0.0, %v984
        %v986 = vpop.f32.mrb[0].mxu0
        %v987 = vadd.f32 0.0, %v986
        %v988 = vpop.f32.mrb[0].mxu0
        %v989 = vadd.f32 0.0, %v988
        %v990 = vpop.f32.mrb[0].mxu0
        %v991 = vadd.f32 0.0, %v990
        %992 = vmatprep.mubr.bf16.mxu0 0
        %993 = vmatmul.mubr.bf16.gmra.mrb[0].mxu0 %v863
        %v994 = vpop.f32.mrb[0].mxu0
        %v995 = vadd.f32 0.0, %v994
        %v996 = vpop.f32.mrb[0].mxu0
        %v997 = vadd.f32 0.0, %v996
        %v998 = vpop.f32.mrb[0].mxu0
        %v999 = vadd.f32 0.0, %v998
        %v1000 = vpop.f32.mrb[0].mxu0
        %v1001 = vadd.f32 0.0, %v1000
        %1002 = vmatprep.mubr.bf16.mxu0 0
        %1003 = vmatmul.mubr.bf16.gmra.mrb[0].mxu0 %v864
        %v1004 = vpop.f32.mrb[0].mxu0
        %v1005 = vadd.f32 0.0, %v1004
        %v1006 = vpop.f32.mrb[0].mxu0
        %v1007 = vadd.f32 0.0, %v1006
        %v1008 = vpop.f32.mrb[0].mxu0
        %v1009 = vadd.f32 0.0, %v1008
        %v1010 = vpop.f32.mrb[0].mxu0
        %v1011 = vadd.f32 0.0, %v1010
        %1012 = vmatprep.mubr.bf16.mxu0 0
        %1013 = vmatmul.mubr.bf16.gmra.mrb[0].mxu0 %v865
        %v1014 = vpop.f32.mrb[0].mxu0
        %v1015 = vadd.f32 0.0, %v1014
        %v1016 = vpop.f32.mrb[0].mxu0
        %v1017 = vadd.f32 0.0, %v1016
        %v1018 = vpop.f32.mrb[0].mxu0
        %v1019 = vadd.f32 0.0, %v1018
        %v1020 = vpop.f32.mrb[0].mxu0
        %v1021 = vadd.f32 0.0, %v1020
        %1022 = vmatprep.mubr.bf16.mxu0 0
        %1023 = vmatmul.mubr.bf16.gmra.mrb[0].mxu0 %v866
        %v1024 = vpop.f32.mrb[0].mxu0
        %v1025 = vadd.f32 0.0, %v1024
        %v1026 = vpop.f32.mrb[0].mxu0
        %v1027 = vadd.f32 0.0, %v1026
        %v1028 = vpop.f32.mrb[0].mxu0
        %v1029 = vadd.f32 0.0, %v1028
        %v1030 = vpop.f32.mrb[0].mxu0
        %v1031 = vadd.f32 0.0, %v1030
        %1032 = vmatprep.mubr.bf16.mxu0 0
        %1033 = vmatmul.mubr.bf16.gmra.mrb[0].mxu0 %v867
        %v1034 = vpop.f32.mrb[0].mxu0
        %v1035 = vadd.f32 0.0, %v1034
        %v1036 = vpop.f32.mrb[0].mxu0
        %v1037 = vadd.f32 0.0, %v1036
        %v1038 = vpop.f32.mrb[0].mxu0
        %v1039 = vadd.f32 0.0, %v1038
        %v1040 = vpop.f32.mrb[0].mxu0
        %v1041 = vadd.f32 0.0, %v1040
        %1042 = vmatprep.mubr.bf16.mxu0 0
        %1043 = vmatmul.mubr.bf16.gmra.mrb[0].mxu0 %v868
        %v1044 = vpop.f32.mrb[0].mxu0
        %v1045 = vadd.f32 0.0, %v1044
        %v1046 = vpop.f32.mrb[0].mxu0
        %v1047 = vadd.f32 0.0, %v1046
        %v1048 = vpop.f32.mrb[0].mxu0
        %v1049 = vadd.f32 0.0, %v1048
        %v1050 = vpop.f32.mrb[0].mxu0
        %v1051 = vadd.f32 0.0, %v1050
        %1052 = vmatprep.mubr.bf16.mxu0 0
        %1053 = vmatmul.mubr.bf16.gmra.mrb[0].mxu0 %v869
        %v1054 = vpop.f32.mrb[0].mxu0
        %v1055 = vadd.f32 0.0, %v1054
        %v1056 = vpop.f32.mrb[0].mxu0
        %v1057 = vadd.f32 0.0, %v1056
        %v1058 = vpop.f32.mrb[0].mxu0
        %v1059 = vadd.f32 0.0, %v1058
        %v1060 = vpop.f32.mrb[0].mxu0
        %v1061 = vadd.f32 0.0, %v1060
        %1062 = vdwg.mxu0
        %v1063 = vmul.f32 %v905, 1.442695
        %v1064 = vpow.pop %v1063
        %v1065 = vmul.f32 %v907, 1.442695
        %v1066 = vpow.pop %v1065
        %v1067 = vmul.f32 %v909, 1.442695
        %v1068 = vpow.pop %v1067
        %v1069 = vmul.f32 %v911, 1.442695
        %v1070 = vpow.pop %v1069
        %v1071 = vmul.f32 %v915, 1.442695
        %v1072 = vpow.pop %v1071
        %v1073 = vmul.f32 %v917, 1.442695
        %v1074 = vpow.pop %v1073
        %v1075 = vmul.f32 %v919, 1.442695
        %v1076 = vpow.pop %v1075
        %v1077 = vmul.f32 %v921, 1.442695
        %v1078 = vpow.pop %v1077
        %v1079 = vmul.f32 %v925, 1.442695
        %v1080 = vpow.pop %v1079
        %v1081 = vmul.f32 %v927, 1.442695
        %v1082 = vpow.pop %v1081
        %v1083 = vmul.f32 %v929, 1.442695
        %v1084 = vpow.pop %v1083
        %v1085 = vmul.f32 %v931, 1.442695
        %v1086 = vpow.pop %v1085
        %v1087 = vmul.f32 %v935, 1.442695
        %v1088 = vpow.pop %v1087
        %v1089 = vmul.f32 %v937, 1.442695
        %v1090 = vpow.pop %v1089
        %v1091 = vmul.f32 %v939, 1.442695
        %v1092 = vpow.pop %v1091
        %v1093 = vmul.f32 %v941, 1.442695
        %v1094 = vpow.pop %v1093
        %v1095 = vmul.f32 %v945, 1.442695
        %v1096 = vpow.pop %v1095
        %v1097 = vmul.f32 %v947, 1.442695
        %v1098 = vpow.pop %v1097
        %v1099 = vmul.f32 %v949, 1.442695
        %v1100 = vpow.pop %v1099
        %v1101 = vmul.f32 %v951, 1.442695
        %v1102 = vpow.pop %v1101
        %v1103 = vmul.f32 %v955, 1.442695
        %v1104 = vpow.pop %v1103
        %v1105 = vmul.f32 %v957, 1.442695
        %v1106 = vpow.pop %v1105
        %v1107 = vmul.f32 %v959, 1.442695
        %v1108 = vpow.pop %v1107
        %v1109 = vmul.f32 %v961, 1.442695
        %v1110 = vpow.pop %v1109
        %v1111 = vmul.f32 %v965, 1.442695
        %v1112 = vpow.pop %v1111
        %v1113 = vmul.f32 %v967, 1.442695
        %v1114 = vpow.pop %v1113
        %v1115 = vmul.f32 %v969, 1.442695
        %v1116 = vpow.pop %v1115
        %v1117 = vmul.f32 %v971, 1.442695
        %v1118 = vpow.pop %v1117
        %v1119 = vmul.f32 %v975, 1.442695
        %v1120 = vpow.pop %v1119
        %v1121 = vmul.f32 %v977, 1.442695
        %v1122 = vpow.pop %v1121
        %v1123 = vmul.f32 %v979, 1.442695
        %v1124 = vpow.pop %v1123
        %v1125 = vmul.f32 %v981, 1.442695
        %v1126 = vpow.pop %v1125
        %v1127 = vmul.f32 %v985, 1.442695
        %v1128 = vpow.pop %v1127
        %v1129 = vmul.f32 %v987, 1.442695
        %v1130 = vpow.pop %v1129
        %v1131 = vmul.f32 %v989, 1.442695
        %v1132 = vpow.pop %v1131
        %v1133 = vmul.f32 %v991, 1.442695
        %v1134 = vpow.pop %v1133
        %v1135 = vmul.f32 %v995, 1.442695
        %v1136 = vpow.pop %v1135
        %v1137 = vmul.f32 %v997, 1.442695
        %v1138 = vpow.pop %v1137
        %v1139 = vmul.f32 %v999, 1.442695
        %v1140 = vpow.pop %v1139
        %v1141 = vmul.f32 %v1001, 1.442695
        %v1142 = vpow.pop %v1141
        %v1143 = vmul.f32 %v1005, 1.442695
        %v1144 = vpow.pop %v1143
        %v1145 = vmul.f32 %v1007, 1.442695
        %v1146 = vpow.pop %v1145
        %v1147 = vmul.f32 %v1009, 1.442695
        %v1148 = vpow.pop %v1147
        %v1149 = vmul.f32 %v1011, 1.442695
        %v1150 = vpow.pop %v1149
        %v1151 = vmul.f32 %v1015, 1.442695
        %v1152 = vpow.pop %v1151
        %v1153 = vmul.f32 %v1017, 1.442695
        %v1154 = vpow.pop %v1153
        %v1155 = vmul.f32 %v1019, 1.442695
        %v1156 = vpow.pop %v1155
        %v1157 = vmul.f32 %v1021, 1.442695
        %v1158 = vpow.pop %v1157
        %v1159 = vmul.f32 %v1025, 1.442695
        %v1160 = vpow.pop %v1159
        %v1161 = vmul.f32 %v1027, 1.442695
        %v1162 = vpow.pop %v1161
        %v1163 = vmul.f32 %v1029, 1.442695
        %v1164 = vpow.pop %v1163
        %v1165 = vmul.f32 %v1031, 1.442695
        %v1166 = vpow.pop %v1165
        %v1167 = vmul.f32 %v1035, 1.442695
        %v1168 = vpow.pop %v1167
        %v1169 = vmul.f32 %v1037, 1.442695
        %v1170 = vpow.pop %v1169
        %v1171 = vmul.f32 %v1039, 1.442695
        %v1172 = vpow.pop %v1171
        %v1173 = vmul.f32 %v1041, 1.442695
        %v1174 = vpow.pop %v1173
        %v1175 = vmul.f32 %v1045, 1.442695
        %v1176 = vpow.pop %v1175
        %v1177 = vmul.f32 %v1047, 1.442695
        %v1178 = vpow.pop %v1177
        %v1179 = vmul.f32 %v1049, 1.442695
        %v1180 = vpow.pop %v1179
        %v1181 = vmul.f32 %v1051, 1.442695
        %v1182 = vpow.pop %v1181
        %v1183 = vmul.f32 %v1055, 1.442695
        %v1184 = vpow.pop %v1183
        %v1185 = vmul.f32 %v1057, 1.442695
        %v1186 = vpow.pop %v1185
        %v1187 = vmul.f32 %v1059, 1.442695
        %v1188 = vpow.pop %v1187
        %v1189 = vmul.f32 %v1061, 1.442695
        %v1190 = vpow.pop %v1189
        %v1191 = vld [vmem:[#allocation3] sm:$0xff]
        %v1192 = vld [vmem:[#allocation3 + $0x8] sm:$0xff]
        %v1193 = vld [vmem:[#allocation3 + $0x10] sm:$0xff]
        %v1194 = vld [vmem:[#allocation3 + $0x18] sm:$0xff]
        %v1195 = vld [vmem:[#allocation3 + $0x20] sm:$0xff]
        %v1196 = vld [vmem:[#allocation3 + $0x28] sm:$0xff]
        %v1197 = vld [vmem:[#allocation3 + $0x30] sm:$0xff]
        %v1198 = vld [vmem:[#allocation3 + $0x38] sm:$0xff]
        %v1199 = vld [vmem:[#allocation3 + $0x40] sm:$0xff]
        %v1200 = vld [vmem:[#allocation3 + $0x48] sm:$0xff]
        %v1201 = vld [vmem:[#allocation3 + $0x50] sm:$0xff]
        %v1202 = vld [vmem:[#allocation3 + $0x58] sm:$0xff]
        %v1203 = vld [vmem:[#allocation3 + $0x60] sm:$0xff]
        %v1204 = vld [vmem:[#allocation3 + $0x68] sm:$0xff]
        %v1205 = vld [vmem:[#allocation3 + $0x70] sm:$0xff]
        %v1206 = vld [vmem:[#allocation3 + $0x78] sm:$0xff]
        %v1207 = vld [vmem:[#allocation3 + $0x80] sm:$0xff]
        %v1208 = vld [vmem:[#allocation3 + $0x88] sm:$0xff]
        %v1209 = vld [vmem:[#allocation3 + $0x90] sm:$0xff]
        %v1210 = vld [vmem:[#allocation3 + $0x98] sm:$0xff]
        %v1211 = vld [vmem:[#allocation3 + $0xa0] sm:$0xff]
        %v1212 = vld [vmem:[#allocation3 + $0xa8] sm:$0xff]
        %v1213 = vld [vmem:[#allocation3 + $0xb0] sm:$0xff]
        %v1214 = vld [vmem:[#allocation3 + $0xb8] sm:$0xff]
        %v1215 = vld [vmem:[#allocation3 + $0xc0] sm:$0xff]
        %v1216 = vld [vmem:[#allocation3 + $0xc8] sm:$0xff]
        %v1217 = vld [vmem:[#allocation3 + $0xd0] sm:$0xff]
        %v1218 = vld [vmem:[#allocation3 + $0xd8] sm:$0xff]
        %v1219 = vld [vmem:[#allocation3 + $0xe0] sm:$0xff]
        %v1220 = vld [vmem:[#allocation3 + $0xe8] sm:$0xff]
        %v1221 = vld [vmem:[#allocation3 + $0xf0] sm:$0xff]
        %v1222 = vld [vmem:[#allocation3 + $0xf8] sm:$0xff]
        %v1223 = vadd.f32 %v1064, %v1066
        %1224 = vadd.xlane.f32.xlu0 %v1223
        %v1225 = vpop.xlane.xlu0 %1224
        %v1226 = vadd.f32 %v1068, %v1070
        %1227 = vadd.xlane.f32.xlu0 %v1226
        %v1228 = vpop.xlane.xlu0 %1227
        %v1229 = vadd.f32 %v1072, %v1074
        %1230 = vadd.xlane.f32.xlu0 %v1229
        %v1231 = vpop.xlane.xlu0 %1230
        %v1232 = vadd.f32 %v1076, %v1078
        %1233 = vadd.xlane.f32.xlu0 %v1232
        %v1234 = vpop.xlane.xlu0 %1233
        %v1235 = vadd.f32 %v1080, %v1082
        %1236 = vadd.xlane.f32.xlu0 %v1235
        %v1237 = vpop.xlane.xlu0 %1236
        %v1238 = vadd.f32 %v1084, %v1086
        %1239 = vadd.xlane.f32.xlu0 %v1238
        %v1240 = vpop.xlane.xlu0 %1239
        %v1241 = vadd.f32 %v1088, %v1090
        %1242 = vadd.xlane.f32.xlu0 %v1241
        %v1243 = vpop.xlane.xlu0 %1242
        %v1244 = vadd.f32 %v1092, %v1094
        %1245 = vadd.xlane.f32.xlu0 %v1244
        %v1246 = vpop.xlane.xlu0 %1245
        %v1247 = vadd.f32 %v1096, %v1098
        %1248 = vadd.xlane.f32.xlu0 %v1247
        %v1249 = vpop.xlane.xlu0 %1248
        %v1250 = vadd.f32 %v1100, %v1102
        %1251 = vadd.xlane.f32.xlu0 %v1250
        %v1252 = vpop.xlane.xlu0 %1251
        %v1253 = vadd.f32 %v1104, %v1106
        %1254 = vadd.xlane.f32.xlu0 %v1253
        %v1255 = vpop.xlane.xlu0 %1254
        %v1256 = vadd.f32 %v1108, %v1110
        %1257 = vadd.xlane.f32.xlu0 %v1256
        %v1258 = vpop.xlane.xlu0 %1257
        %v1259 = vadd.f32 %v1112, %v1114
        %1260 = vadd.xlane.f32.xlu0 %v1259
        %v1261 = vpop.xlane.xlu0 %1260
        %v1262 = vadd.f32 %v1116, %v1118
        %1263 = vadd.xlane.f32.xlu0 %v1262
        %v1264 = vpop.xlane.xlu0 %1263
        %v1265 = vadd.f32 %v1120, %v1122
        %1266 = vadd.xlane.f32.xlu0 %v1265
        %v1267 = vpop.xlane.xlu0 %1266
        %v1268 = vadd.f32 %v1124, %v1126
        %1269 = vadd.xlane.f32.xlu0 %v1268
        %v1270 = vpop.xlane.xlu0 %1269
        %v1271 = vadd.f32 %v1128, %v1130
        %1272 = vadd.xlane.f32.xlu0 %v1271
        %v1273 = vpop.xlane.xlu0 %1272
        %v1274 = vadd.f32 %v1132, %v1134
        %1275 = vadd.xlane.f32.xlu0 %v1274
        %v1276 = vpop.xlane.xlu0 %1275
        %v1277 = vadd.f32 %v1136, %v1138
        %1278 = vadd.xlane.f32.xlu0 %v1277
        %v1279 = vpop.xlane.xlu0 %1278
        %v1280 = vadd.f32 %v1140, %v1142
        %1281 = vadd.xlane.f32.xlu0 %v1280
        %v1282 = vpop.xlane.xlu0 %1281
        %v1283 = vadd.f32 %v1144, %v1146
        %1284 = vadd.xlane.f32.xlu0 %v1283
        %v1285 = vpop.xlane.xlu0 %1284
        %v1286 = vadd.f32 %v1148, %v1150
        %1287 = vadd.xlane.f32.xlu0 %v1286
        %v1288 = vpop.xlane.xlu0 %1287
        %v1289 = vadd.f32 %v1152, %v1154
        %1290 = vadd.xlane.f32.xlu0 %v1289
        %v1291 = vpop.xlane.xlu0 %1290
        %v1292 = vadd.f32 %v1156, %v1158
        %1293 = vadd.xlane.f32.xlu0 %v1292
        %v1294 = vpop.xlane.xlu0 %1293
        %v1295 = vadd.f32 %v1160, %v1162
        %1296 = vadd.xlane.f32.xlu0 %v1295
        %v1297 = vpop.xlane.xlu0 %1296
        %v1298 = vadd.f32 %v1164, %v1166
        %1299 = vadd.xlane.f32.xlu0 %v1298
        %v1300 = vpop.xlane.xlu0 %1299
        %v1301 = vadd.f32 %v1168, %v1170
        %1302 = vadd.xlane.f32.xlu0 %v1301
        %v1303 = vpop.xlane.xlu0 %1302
        %v1304 = vadd.f32 %v1172, %v1174
        %1305 = vadd.xlane.f32.xlu0 %v1304
        %v1306 = vpop.xlane.xlu0 %1305
        %v1307 = vadd.f32 %v1176, %v1178
        %1308 = vadd.xlane.f32.xlu0 %v1307
        %v1309 = vpop.xlane.xlu0 %1308
        %v1310 = vadd.f32 %v1180, %v1182
        %1311 = vadd.xlane.f32.xlu0 %v1310
        %v1312 = vpop.xlane.xlu0 %1311
        %v1313 = vadd.f32 %v1184, %v1186
        %1314 = vadd.xlane.f32.xlu0 %v1313
        %v1315 = vpop.xlane.xlu0 %1314
        %v1316 = vadd.f32 %v1188, %v1190
        %1317 = vadd.xlane.f32.xlu0 %v1316
        %v1318 = vpop.xlane.xlu0 %1317
        %v1319 = vadd.f32 %v1191, %v1225
        %v1320 = vadd.f32 %v1192, %v1228
        %v1321 = vadd.f32 %v1193, %v1231
        %v1322 = vadd.f32 %v1194, %v1234
        %v1323 = vadd.f32 %v1195, %v1237
        %v1324 = vadd.f32 %v1196, %v1240
        %v1325 = vadd.f32 %v1197, %v1243
        %v1326 = vadd.f32 %v1198, %v1246
        %v1327 = vadd.f32 %v1199, %v1249
        %v1328 = vadd.f32 %v1200, %v1252
        %v1329 = vadd.f32 %v1201, %v1255
        %v1330 = vadd.f32 %v1202, %v1258
        %v1331 = vadd.f32 %v1203, %v1261
        %v1332 = vadd.f32 %v1204, %v1264
        %v1333 = vadd.f32 %v1205, %v1267
        %v1334 = vadd.f32 %v1206, %v1270
        %v1335 = vadd.f32 %v1207, %v1273
        %v1336 = vadd.f32 %v1208, %v1276
        %v1337 = vadd.f32 %v1209, %v1279
        %v1338 = vadd.f32 %v1210, %v1282
        %v1339 = vadd.f32 %v1211, %v1285
        %v1340 = vadd.f32 %v1212, %v1288
        %v1341 = vadd.f32 %v1213, %v1291
        %v1342 = vadd.f32 %v1214, %v1294
        %v1343 = vadd.f32 %v1215, %v1297
        %v1344 = vadd.f32 %v1216, %v1300
        %v1345 = vadd.f32 %v1217, %v1303
        %v1346 = vadd.f32 %v1218, %v1306
        %v1347 = vadd.f32 %v1219, %v1309
        %v1348 = vadd.f32 %v1220, %v1312
        %v1349 = vadd.f32 %v1221, %v1315
        %v1350 = vadd.f32 %v1222, %v1318
        %vm1351 = vcmask 7168
        %1352 = vst.msk [vmem:[#allocation3] sm:$0xff] %vm1351, %v1319
        %1353 = vst.msk [vmem:[#allocation3 + $0x8] sm:$0xff] %vm1351, %v1320
        %1354 = vst.msk [vmem:[#allocation3 + $0x10] sm:$0xff] %vm1351, %v1321
        %1355 = vst.msk [vmem:[#allocation3 + $0x18] sm:$0xff] %vm1351, %v1322
        %1356 = vst.msk [vmem:[#allocation3 + $0x20] sm:$0xff] %vm1351, %v1323
        %1357 = vst.msk [vmem:[#allocation3 + $0x28] sm:$0xff] %vm1351, %v1324
        %1358 = vst.msk [vmem:[#allocation3 + $0x30] sm:$0xff] %vm1351, %v1325
        %1359 = vst.msk [vmem:[#allocation3 + $0x38] sm:$0xff] %vm1351, %v1326
        %1360 = vst.msk [vmem:[#allocation3 + $0x40] sm:$0xff] %vm1351, %v1327
        %1361 = vst.msk [vmem:[#allocation3 + $0x48] sm:$0xff] %vm1351, %v1328
        %1362 = vst.msk [vmem:[#allocation3 + $0x50] sm:$0xff] %vm1351, %v1329
        %1363 = vst.msk [vmem:[#allocation3 + $0x58] sm:$0xff] %vm1351, %v1330
        %1364 = vst.msk [vmem:[#allocation3 + $0x60] sm:$0xff] %vm1351, %v1331
        %1365 = vst.msk [vmem:[#allocation3 + $0x68] sm:$0xff] %vm1351, %v1332
        %1366 = vst.msk [vmem:[#allocation3 + $0x70] sm:$0xff] %vm1351, %v1333
        %1367 = vst.msk [vmem:[#allocation3 + $0x78] sm:$0xff] %vm1351, %v1334
        %1368 = vst.msk [vmem:[#allocation3 + $0x80] sm:$0xff] %vm1351, %v1335
        %1369 = vst.msk [vmem:[#allocation3 + $0x88] sm:$0xff] %vm1351, %v1336
        %1370 = vst.msk [vmem:[#allocation3 + $0x90] sm:$0xff] %vm1351, %v1337
        %1371 = vst.msk [vmem:[#allocation3 + $0x98] sm:$0xff] %vm1351, %v1338
        %1372 = vst.msk [vmem:[#allocation3 + $0xa0] sm:$0xff] %vm1351, %v1339
        %1373 = vst.msk [vmem:[#allocation3 + $0xa8] sm:$0xff] %vm1351, %v1340
        %1374 = vst.msk [vmem:[#allocation3 + $0xb0] sm:$0xff] %vm1351, %v1341
        %1375 = vst.msk [vmem:[#allocation3 + $0xb8] sm:$0xff] %vm1351, %v1342
        %1376 = vst.msk [vmem:[#allocation3 + $0xc0] sm:$0xff] %vm1351, %v1343
        %1377 = vst.msk [vmem:[#allocation3 + $0xc8] sm:$0xff] %vm1351, %v1344
        %1378 = vst.msk [vmem:[#allocation3 + $0xd0] sm:$0xff] %vm1351, %v1345
        %1379 = vst.msk [vmem:[#allocation3 + $0xd8] sm:$0xff] %vm1351, %v1346
        %1380 = vst.msk [vmem:[#allocation3 + $0xe0] sm:$0xff] %vm1351, %v1347
        %1381 = vst.msk [vmem:[#allocation3 + $0xe8] sm:$0xff] %vm1351, %v1348
        %1382 = vst.msk [vmem:[#allocation3 + $0xf0] sm:$0xff] %vm1351, %v1349
        %1383 = vst.msk [vmem:[#allocation3 + $0xf8] sm:$0xff] %vm1351, %v1350
        %v1384 = vld [vmem:[#allocation4] sm:$0xff]
        %v1385 = vld [vmem:[#allocation4 + $0x8] sm:$0xff]
        %v1386 = vld [vmem:[#allocation4 + $0x10] sm:$0xff]
        %v1387 = vld [vmem:[#allocation4 + $0x18] sm:$0xff]
        %v1388 = vld [vmem:[#allocation4 + $0x20] sm:$0xff]
        %v1389 = vld [vmem:[#allocation4 + $0x28] sm:$0xff]
        %v1390 = vld [vmem:[#allocation4 + $0x30] sm:$0xff]
        %v1391 = vld [vmem:[#allocation4 + $0x38] sm:$0xff]
        %v1392 = vld [vmem:[#allocation4 + $0x40] sm:$0xff]
        %v1393 = vld [vmem:[#allocation4 + $0x48] sm:$0xff]
        %v1394 = vld [vmem:[#allocation4 + $0x50] sm:$0xff]
        %v1395 = vld [vmem:[#allocation4 + $0x58] sm:$0xff]
        %v1396 = vld [vmem:[#allocation4 + $0x60] sm:$0xff]
        %v1397 = vld [vmem:[#allocation4 + $0x68] sm:$0xff]
        %v1398 = vld [vmem:[#allocation4 + $0x70] sm:$0xff]
        %v1399 = vld [vmem:[#allocation4 + $0x78] sm:$0xff]
        %v1400 = vld [vmem:[#allocation4 + $0x80] sm:$0xff]
        %v1401 = vld [vmem:[#allocation4 + $0x88] sm:$0xff]
        %v1402 = vld [vmem:[#allocation4 + $0x90] sm:$0xff]
        %v1403 = vld [vmem:[#allocation4 + $0x98] sm:$0xff]
        %v1404 = vld [vmem:[#allocation4 + $0xa0] sm:$0xff]
        %v1405 = vld [vmem:[#allocation4 + $0xa8] sm:$0xff]
        %v1406 = vld [vmem:[#allocation4 + $0xb0] sm:$0xff]
        %v1407 = vld [vmem:[#allocation4 + $0xb8] sm:$0xff]
        %v1408 = vld [vmem:[#allocation4 + $0xc0] sm:$0xff]
        %v1409 = vld [vmem:[#allocation4 + $0xc8] sm:$0xff]
        %v1410 = vld [vmem:[#allocation4 + $0xd0] sm:$0xff]
        %v1411 = vld [vmem:[#allocation4 + $0xd8] sm:$0xff]
        %v1412 = vld [vmem:[#allocation4 + $0xe0] sm:$0xff]
        %v1413 = vld [vmem:[#allocation4 + $0xe8] sm:$0xff]
        %v1414 = vld [vmem:[#allocation4 + $0xf0] sm:$0xff]
        %v1415 = vld [vmem:[#allocation4 + $0xf8] sm:$0xff]
        %v1416 = vpack.c.bf16 %v1068, %v1064
        %v1417 = vpack.c.bf16 %v1070, %v1066
        %v1418 = vpack.c.bf16 %v1076, %v1072
        %v1419 = vpack.c.bf16 %v1078, %v1074
        %v1420 = vpack.c.bf16 %v1084, %v1080
        %v1421 = vpack.c.bf16 %v1086, %v1082
        %v1422 = vpack.c.bf16 %v1092, %v1088
        %v1423 = vpack.c.bf16 %v1094, %v1090
        %v1424 = vpack.c.bf16 %v1100, %v1096
        %v1425 = vpack.c.bf16 %v1102, %v1098
        %v1426 = vpack.c.bf16 %v1108, %v1104
        %v1427 = vpack.c.bf16 %v1110, %v1106
        %v1428 = vpack.c.bf16 %v1116, %v1112
        %v1429 = vpack.c.bf16 %v1118, %v1114
        %v1430 = vpack.c.bf16 %v1124, %v1120
        %v1431 = vpack.c.bf16 %v1126, %v1122
        %v1432 = vpack.c.bf16 %v1132, %v1128
        %v1433 = vpack.c.bf16 %v1134, %v1130
        %v1434 = vpack.c.bf16 %v1140, %v1136
        %v1435 = vpack.c.bf16 %v1142, %v1138
        %v1436 = vpack.c.bf16 %v1148, %v1144
        %v1437 = vpack.c.bf16 %v1150, %v1146
        %v1438 = vpack.c.bf16 %v1156, %v1152
        %v1439 = vpack.c.bf16 %v1158, %v1154
        %v1440 = vpack.c.bf16 %v1164, %v1160
        %v1441 = vpack.c.bf16 %v1166, %v1162
        %v1442 = vpack.c.bf16 %v1172, %v1168
        %v1443 = vpack.c.bf16 %v1174, %v1170
        %v1444 = vpack.c.bf16 %v1180, %v1176
        %v1445 = vpack.c.bf16 %v1182, %v1178
        %v1446 = vpack.c.bf16 %v1188, %v1184
        %v1447 = vpack.c.bf16 %v1190, %v1186
        %v1448 = vpack.c.bf16 %v615, %v614
        %v1449 = vpack.c.bf16 %v617, %v616
        %v1450 = vpack.c.bf16 %v619, %v618
        %v1451 = vpack.c.bf16 %v621, %v620
        %v1452 = vpack.c.bf16 %v623, %v622
        %v1453 = vpack.c.bf16 %v625, %v624
        %v1454 = vpack.c.bf16 %v627, %v626
        %v1455 = vpack.c.bf16 %v629, %v628
        %v1456 = vpack.c.bf16 %v631, %v630
        %v1457 = vpack.c.bf16 %v633, %v632
        %v1458 = vpack.c.bf16 %v635, %v634
        %v1459 = vpack.c.bf16 %v637, %v636
        %v1460 = vpack.c.bf16 %v639, %v638
        %v1461 = vpack.c.bf16 %v641, %v640
        %v1462 = vpack.c.bf16 %v643, %v642
        %v1463 = vpack.c.bf16 %v645, %v644
        %1464 = vmatprep.subr.bf16.mxu0 0
        %1465 = vmatpush1.bf16.msra.mxu0 %v1448
        %1466 = vmatprep.subr.bf16.mxu0 0
        %1467 = vmatpush1.bf16.msra.mxu0 %v1449
        %1468 = vmatprep.subr.bf16.mxu0 0
        %1469 = vmatpush1.bf16.msra.mxu0 %v1450
        %1470 = vmatprep.subr.bf16.mxu0 0
        %1471 = vmatpush1.bf16.msra.mxu0 %v1451
        %1472 = vmatprep.subr.bf16.mxu0 0
        %1473 = vmatpush1.bf16.msra.mxu0 %v1452
        %1474 = vmatprep.subr.bf16.mxu0 0
        %1475 = vmatpush1.bf16.msra.mxu0 %v1453
        %1476 = vmatprep.subr.bf16.mxu0 0
        %1477 = vmatpush1.bf16.msra.mxu0 %v1454
        %1478 = vmatprep.subr.bf16.mxu0 0
        %1479 = vmatpush1.bf16.msra.mxu0 %v1455
        %1480 = vmatprep.subr.bf16.mxu0 0
        %1481 = vmatpush1.bf16.msra.mxu0 %v1456
        %1482 = vmatprep.subr.bf16.mxu0 0
        %1483 = vmatpush1.bf16.msra.mxu0 %v1457
        %1484 = vmatprep.subr.bf16.mxu0 0
        %1485 = vmatpush1.bf16.msra.mxu0 %v1458
        %1486 = vmatprep.subr.bf16.mxu0 0
        %1487 = vmatpush1.bf16.msra.mxu0 %v1459
        %1488 = vmatprep.subr.bf16.mxu0 0
        %1489 = vmatpush1.bf16.msra.mxu0 %v1460
        %1490 = vmatprep.subr.bf16.mxu0 0
        %1491 = vmatpush1.bf16.msra.mxu0 %v1461
        %1492 = vmatprep.subr.bf16.mxu0 0
        %1493 = vmatpush1.bf16.msra.mxu0 %v1462
        %1494 = vmatprep.subr.bf16.mxu0 0
        %1495 = vmatpush1.bf16.msra.mxu0 %v1463
        %1496 = vmatprep.mubr.bf16.mxu0 %v1417
        %1497 = vmatmul.mubr.bf16.gmra.mrb[0].mxu0 %v1416
        %v1498 = vpop.f32.mrb[0].mxu0
        %v1499 = vadd.f32 0.0, %v1498
        %v1500 = vpop.f32.mrb[0].mxu0
        %v1501 = vpop.f32.mrb[0].mxu0
        %v1502 = vadd.f32 0.0, %v1501
        %v1503 = vpop.f32.mrb[0].mxu0
        %1504 = vmatprep.mubr.bf16.mxu0 %v1419
        %1505 = vmatmul.mubr.bf16.gmra.mrb[0].mxu0 %v1418
        %v1506 = vpop.f32.mrb[0].mxu0
        %v1507 = vadd.f32 0.0, %v1506
        %v1508 = vpop.f32.mrb[0].mxu0
        %v1509 = vpop.f32.mrb[0].mxu0
        %v1510 = vadd.f32 0.0, %v1509
        %v1511 = vpop.f32.mrb[0].mxu0
        %1512 = vmatprep.mubr.bf16.mxu0 %v1421
        %1513 = vmatmul.mubr.bf16.gmra.mrb[0].mxu0 %v1420
        %v1514 = vpop.f32.mrb[0].mxu0
        %v1515 = vadd.f32 0.0, %v1514
        %v1516 = vpop.f32.mrb[0].mxu0
        %v1517 = vpop.f32.mrb[0].mxu0
        %v1518 = vadd.f32 0.0, %v1517
        %v1519 = vpop.f32.mrb[0].mxu0
        %1520 = vmatprep.mubr.bf16.mxu0 %v1423
        %1521 = vmatmul.mubr.bf16.gmra.mrb[0].mxu0 %v1422
        %v1522 = vpop.f32.mrb[0].mxu0
        %v1523 = vadd.f32 0.0, %v1522
        %v1524 = vpop.f32.mrb[0].mxu0
        %v1525 = vpop.f32.mrb[0].mxu0
        %v1526 = vadd.f32 0.0, %v1525
        %v1527 = vpop.f32.mrb[0].mxu0
        %1528 = vmatprep.mubr.bf16.mxu0 %v1425
        %1529 = vmatmul.mubr.bf16.gmra.mrb[0].mxu0 %v1424
        %v1530 = vpop.f32.mrb[0].mxu0
        %v1531 = vadd.f32 0.0, %v1530
        %v1532 = vpop.f32.mrb[0].mxu0
        %v1533 = vpop.f32.mrb[0].mxu0
        %v1534 = vadd.f32 0.0, %v1533
        %v1535 = vpop.f32.mrb[0].mxu0
        %1536 = vmatprep.mubr.bf16.mxu0 %v1427
        %1537 = vmatmul.mubr.bf16.gmra.mrb[0].mxu0 %v1426
        %v1538 = vpop.f32.mrb[0].mxu0
        %v1539 = vadd.f32 0.0, %v1538
        %v1540 = vpop.f32.mrb[0].mxu0
        %v1541 = vpop.f32.mrb[0].mxu0
        %v1542 = vadd.f32 0.0, %v1541
        %v1543 = vpop.f32.mrb[0].mxu0
        %1544 = vmatprep.mubr.bf16.mxu0 %v1429
        %1545 = vmatmul.mubr.bf16.gmra.mrb[0].mxu0 %v1428
        %v1546 = vpop.f32.mrb[0].mxu0
        %v1547 = vadd.f32 0.0, %v1546
        %v1548 = vpop.f32.mrb[0].mxu0
        %v1549 = vpop.f32.mrb[0].mxu0
        %v1550 = vadd.f32 0.0, %v1549
        %v1551 = vpop.f32.mrb[0].mxu0
        %1552 = vmatprep.mubr.bf16.mxu0 %v1431
        %1553 = vmatmul.mubr.bf16.gmra.mrb[0].mxu0 %v1430
        %v1554 = vpop.f32.mrb[0].mxu0
        %v1555 = vadd.f32 0.0, %v1554
        %v1556 = vpop.f32.mrb[0].mxu0
        %v1557 = vpop.f32.mrb[0].mxu0
        %v1558 = vadd.f32 0.0, %v1557
        %v1559 = vpop.f32.mrb[0].mxu0
        %1560 = vmatprep.mubr.bf16.mxu0 %v1433
        %1561 = vmatmul.mubr.bf16.gmra.mrb[0].mxu0 %v1432
        %v1562 = vpop.f32.mrb[0].mxu0
        %v1563 = vadd.f32 0.0, %v1562
        %v1564 = vpop.f32.mrb[0].mxu0
        %v1565 = vpop.f32.mrb[0].mxu0
        %v1566 = vadd.f32 0.0, %v1565
        %v1567 = vpop.f32.mrb[0].mxu0
        %1568 = vmatprep.mubr.bf16.mxu0 %v1435
        %1569 = vmatmul.mubr.bf16.gmra.mrb[0].mxu0 %v1434
        %v1570 = vpop.f32.mrb[0].mxu0
        %v1571 = vadd.f32 0.0, %v1570
        %v1572 = vpop.f32.mrb[0].mxu0
        %v1573 = vpop.f32.mrb[0].mxu0
        %v1574 = vadd.f32 0.0, %v1573
        %v1575 = vpop.f32.mrb[0].mxu0
        %1576 = vmatprep.mubr.bf16.mxu0 %v1437
        %1577 = vmatmul.mubr.bf16.gmra.mrb[0].mxu0 %v1436
        %v1578 = vpop.f32.mrb[0].mxu0
        %v1579 = vadd.f32 0.0, %v1578
        %v1580 = vpop.f32.mrb[0].mxu0
        %v1581 = vpop.f32.mrb[0].mxu0
        %v1582 = vadd.f32 0.0, %v1581
        %v1583 = vpop.f32.mrb[0].mxu0
        %1584 = vmatprep.mubr.bf16.mxu0 %v1439
        %1585 = vmatmul.mubr.bf16.gmra.mrb[0].mxu0 %v1438
        %v1586 = vpop.f32.mrb[0].mxu0
        %v1587 = vadd.f32 0.0, %v1586
        %v1588 = vpop.f32.mrb[0].mxu0
        %v1589 = vpop.f32.mrb[0].mxu0
        %v1590 = vadd.f32 0.0, %v1589
        %v1591 = vpop.f32.mrb[0].mxu0
        %1592 = vmatprep.mubr.bf16.mxu0 %v1441
        %1593 = vmatmul.mubr.bf16.gmra.mrb[0].mxu0 %v1440
        %v1594 = vpop.f32.mrb[0].mxu0
        %v1595 = vadd.f32 0.0, %v1594
        %v1596 = vpop.f32.mrb[0].mxu0
        %v1597 = vpop.f32.mrb[0].mxu0
        %v1598 = vadd.f32 0.0, %v1597
        %v1599 = vpop.f32.mrb[0].mxu0
        %1600 = vmatprep.mubr.bf16.mxu0 %v1443
        %1601 = vmatmul.mubr.bf16.gmra.mrb[0].mxu0 %v1442
        %v1602 = vpop.f32.mrb[0].mxu0
        %v1603 = vadd.f32 0.0, %v1602
        %v1604 = vpop.f32.mrb[0].mxu0
        %v1605 = vpop.f32.mrb[0].mxu0
        %v1606 = vadd.f32 0.0, %v1605
        %v1607 = vpop.f32.mrb[0].mxu0
        %1608 = vmatprep.mubr.bf16.mxu0 %v1445
        %1609 = vmatmul.mubr.bf16.gmra.mrb[0].mxu0 %v1444
        %v1610 = vpop.f32.mrb[0].mxu0
        %v1611 = vadd.f32 0.0, %v1610
        %v1612 = vpop.f32.mrb[0].mxu0
        %v1613 = vpop.f32.mrb[0].mxu0
        %v1614 = vadd.f32 0.0, %v1613
        %v1615 = vpop.f32.mrb[0].mxu0
        %1616 = vmatprep.mubr.bf16.mxu0 %v1447
        %1617 = vmatmul.mubr.bf16.gmra.mrb[0].mxu0 %v1446
        %v1618 = vpop.f32.mrb[0].mxu0
        %v1619 = vadd.f32 0.0, %v1618
        %v1620 = vpop.f32.mrb[0].mxu0
        %v1621 = vpop.f32.mrb[0].mxu0
        %v1622 = vadd.f32 0.0, %v1621
        %v1623 = vpop.f32.mrb[0].mxu0
        %1624 = vdwg.mxu0
        %v1625 = vadd.f32 %v1384, %v1499
        %v1626 = vadd.f32 %v1385, %v1502
        %v1627 = vadd.f32 %v1386, %v1507
        %v1628 = vadd.f32 %v1387, %v1510
        %v1629 = vadd.f32 %v1388, %v1515
        %v1630 = vadd.f32 %v1389, %v1518
        %v1631 = vadd.f32 %v1390, %v1523
        %v1632 = vadd.f32 %v1391, %v1526
        %v1633 = vadd.f32 %v1392, %v1531
        %v1634 = vadd.f32 %v1393, %v1534
        %v1635 = vadd.f32 %v1394, %v1539
        %v1636 = vadd.f32 %v1395, %v1542
        %v1637 = vadd.f32 %v1396, %v1547
        %v1638 = vadd.f32 %v1397, %v1550
        %v1639 = vadd.f32 %v1398, %v1555
        %v1640 = vadd.f32 %v1399, %v1558
        %v1641 = vadd.f32 %v1400, %v1563
        %v1642 = vadd.f32 %v1401, %v1566
        %v1643 = vadd.f32 %v1402, %v1571
        %v1644 = vadd.f32 %v1403, %v1574
        %v1645 = vadd.f32 %v1404, %v1579
        %v1646 = vadd.f32 %v1405, %v1582
        %v1647 = vadd.f32 %v1406, %v1587
        %v1648 = vadd.f32 %v1407, %v1590
        %v1649 = vadd.f32 %v1408, %v1595
        %v1650 = vadd.f32 %v1409, %v1598
        %v1651 = vadd.f32 %v1410, %v1603
        %v1652 = vadd.f32 %v1411, %v1606
        %v1653 = vadd.f32 %v1412, %v1611
        %v1654 = vadd.f32 %v1413, %v1614
        %v1655 = vadd.f32 %v1414, %v1619
        %v1656 = vadd.f32 %v1415, %v1622
        %1657 = vst [vmem:[#allocation4] sm:$0xff] %v1625
        %1658 = vst [vmem:[#allocation4 + $0x8] sm:$0xff] %v1626
        %1659 = vst [vmem:[#allocation4 + $0x10] sm:$0xff] %v1627
        %1660 = vst [vmem:[#allocation4 + $0x18] sm:$0xff] %v1628
        %1661 = vst [vmem:[#allocation4 + $0x20] sm:$0xff] %v1629
        %1662 = vst [vmem:[#allocation4 + $0x28] sm:$0xff] %v1630
        %1663 = vst [vmem:[#allocation4 + $0x30] sm:$0xff] %v1631
        %1664 = vst [vmem:[#allocation4 + $0x38] sm:$0xff] %v1632
        %1665 = vst [vmem:[#allocation4 + $0x40] sm:$0xff] %v1633
        %1666 = vst [vmem:[#allocation4 + $0x48] sm:$0xff] %v1634
        %1667 = vst [vmem:[#allocation4 + $0x50] sm:$0xff] %v1635
        %1668 = vst [vmem:[#allocation4 + $0x58] sm:$0xff] %v1636
        %1669 = vst [vmem:[#allocation4 + $0x60] sm:$0xff] %v1637
        %1670 = vst [vmem:[#allocation4 + $0x68] sm:$0xff] %v1638
        %1671 = vst [vmem:[#allocation4 + $0x70] sm:$0xff] %v1639
        %1672 = vst [vmem:[#allocation4 + $0x78] sm:$0xff] %v1640
        %1673 = vst [vmem:[#allocation4 + $0x80] sm:$0xff] %v1641
        %1674 = vst [vmem:[#allocation4 + $0x88] sm:$0xff] %v1642
        %1675 = vst [vmem:[#allocation4 + $0x90] sm:$0xff] %v1643
        %1676 = vst [vmem:[#allocation4 + $0x98] sm:$0xff] %v1644
        %1677 = vst [vmem:[#allocation4 + $0xa0] sm:$0xff] %v1645
        %1678 = vst [vmem:[#allocation4 + $0xa8] sm:$0xff] %v1646
        %1679 = vst [vmem:[#allocation4 + $0xb0] sm:$0xff] %v1647
        %1680 = vst [vmem:[#allocation4 + $0xb8] sm:$0xff] %v1648
        %1681 = vst [vmem:[#allocation4 + $0xc0] sm:$0xff] %v1649
        %1682 = vst [vmem:[#allocation4 + $0xc8] sm:$0xff] %v1650
        %1683 = vst [vmem:[#allocation4 + $0xd0] sm:$0xff] %v1651
        %1684 = vst [vmem:[#allocation4 + $0xd8] sm:$0xff] %v1652
        %1685 = vst [vmem:[#allocation4 + $0xe0] sm:$0xff] %v1653
        %1686 = vst [vmem:[#allocation4 + $0xe8] sm:$0xff] %v1654
        %1687 = vst [vmem:[#allocation4 + $0xf0] sm:$0xff] %v1655
        %1688 = vst [vmem:[#allocation4 + $0xf8] sm:$0xff] %v1656
        // Predicated region
        $region49: #{tpu_custom_call.1} parent=35 // pred_check
          %p1689 = pneg %p289
        $region50: #{tpu_custom_call.1} parent=35 // pred_check_branch
          %1691 = sbr.rel (%p1689) target = $region52
        $region51: #{tpu_custom_call.1} parent=35 // pred_region
          %v1692 = vld [vmem:[%s246] sm:$0xff]
          %v1693 = vld [vmem:[%s246 + $0x8] sm:$0xff]
          %v1694 = vld [vmem:[%s246 + $0x10] sm:$0xff]
          %v1695 = vld [vmem:[%s246 + $0x18] sm:$0xff]
          %v1696 = vld [vmem:[%s246 + $0x20] sm:$0xff]
          %v1697 = vld [vmem:[%s246 + $0x28] sm:$0xff]
          %v1698 = vld [vmem:[%s246 + $0x30] sm:$0xff]
          %v1699 = vld [vmem:[%s246 + $0x38] sm:$0xff]
          %v1700 = vld [vmem:[%s246 + $0x40] sm:$0xff]
          %v1701 = vld [vmem:[%s246 + $0x48] sm:$0xff]
          %v1702 = vld [vmem:[%s246 + $0x50] sm:$0xff]
          %v1703 = vld [vmem:[%s246 + $0x58] sm:$0xff]
          %v1704 = vld [vmem:[%s246 + $0x60] sm:$0xff]
          %v1705 = vld [vmem:[%s246 + $0x68] sm:$0xff]
          %v1706 = vld [vmem:[%s246 + $0x70] sm:$0xff]
          %v1707 = vld [vmem:[%s246 + $0x78] sm:$0xff]
          %v1708 = vld [vmem:[%s246 + $0x80] sm:$0xff]
          %v1709 = vld [vmem:[%s246 + $0x88] sm:$0xff]
          %v1710 = vld [vmem:[%s246 + $0x90] sm:$0xff]
          %v1711 = vld [vmem:[%s246 + $0x98] sm:$0xff]
          %v1712 = vld [vmem:[%s246 + $0xa0] sm:$0xff]
          %v1713 = vld [vmem:[%s246 + $0xa8] sm:$0xff]
          %v1714 = vld [vmem:[%s246 + $0xb0] sm:$0xff]
          %v1715 = vld [vmem:[%s246 + $0xb8] sm:$0xff]
          %v1716 = vld [vmem:[%s246 + $0xc0] sm:$0xff]
          %v1717 = vld [vmem:[%s246 + $0xc8] sm:$0xff]
          %v1718 = vld [vmem:[%s246 + $0xd0] sm:$0xff]
          %v1719 = vld [vmem:[%s246 + $0xd8] sm:$0xff]
          %v1720 = vld [vmem:[%s246 + $0xe0] sm:$0xff]
          %v1721 = vld [vmem:[%s246 + $0xe8] sm:$0xff]
          %v1722 = vld [vmem:[%s246 + $0xf0] sm:$0xff]
          %v1723 = vld [vmem:[%s246 + $0xf8] sm:$0xff]
          %v1724 = vld [vmem:[#allocation3] sm:$0xff]
          %v1725 = vld [vmem:[#allocation3 + $0x8] sm:$0xff]
          %v1726 = vld [vmem:[#allocation3 + $0x10] sm:$0xff]
          %v1727 = vld [vmem:[#allocation3 + $0x18] sm:$0xff]
          %v1728 = vld [vmem:[#allocation3 + $0x20] sm:$0xff]
          %v1729 = vld [vmem:[#allocation3 + $0x28] sm:$0xff]
          %v1730 = vld [vmem:[#allocation3 + $0x30] sm:$0xff]
          %v1731 = vld [vmem:[#allocation3 + $0x38] sm:$0xff]
          %v1732 = vld [vmem:[#allocation3 + $0x40] sm:$0xff]
          %v1733 = vld [vmem:[#allocation3 + $0x48] sm:$0xff]
          %v1734 = vld [vmem:[#allocation3 + $0x50] sm:$0xff]
          %v1735 = vld [vmem:[#allocation3 + $0x58] sm:$0xff]
          %v1736 = vld [vmem:[#allocation3 + $0x60] sm:$0xff]
          %v1737 = vld [vmem:[#allocation3 + $0x68] sm:$0xff]
          %v1738 = vld [vmem:[#allocation3 + $0x70] sm:$0xff]
          %v1739 = vld [vmem:[#allocation3 + $0x78] sm:$0xff]
          %v1740 = vld [vmem:[#allocation3 + $0x80] sm:$0xff]
          %v1741 = vld [vmem:[#allocation3 + $0x88] sm:$0xff]
          %v1742 = vld [vmem:[#allocation3 + $0x90] sm:$0xff]
          %v1743 = vld [vmem:[#allocation3 + $0x98] sm:$0xff]
          %v1744 = vld [vmem:[#allocation3 + $0xa0] sm:$0xff]
          %v1745 = vld [vmem:[#allocation3 + $0xa8] sm:$0xff]
          %v1746 = vld [vmem:[#allocation3 + $0xb0] sm:$0xff]
          %v1747 = vld [vmem:[#allocation3 + $0xb8] sm:$0xff]
          %v1748 = vld [vmem:[#allocation3 + $0xc0] sm:$0xff]
          %v1749 = vld [vmem:[#allocation3 + $0xc8] sm:$0xff]
          %v1750 = vld [vmem:[#allocation3 + $0xd0] sm:$0xff]
          %v1751 = vld [vmem:[#allocation3 + $0xd8] sm:$0xff]
          %v1752 = vld [vmem:[#allocation3 + $0xe0] sm:$0xff]
          %v1753 = vld [vmem:[#allocation3 + $0xe8] sm:$0xff]
          %v1754 = vld [vmem:[#allocation3 + $0xf0] sm:$0xff]
          %v1755 = vld [vmem:[#allocation3 + $0xf8] sm:$0xff]
          %v1756 = vrcp.pop %v1724
          %v1757 = vmul.f32 0.1, %v1756
          %v1758 = vrcp.pop %v1725
          %v1759 = vmul.f32 0.1, %v1758
          %v1760 = vrcp.pop %v1726
          %v1761 = vmul.f32 0.1, %v1760
          %v1762 = vrcp.pop %v1727
          %v1763 = vmul.f32 0.1, %v1762
          %v1764 = vrcp.pop %v1728
          %v1765 = vmul.f32 0.1, %v1764
          %v1766 = vrcp.pop %v1729
          %v1767 = vmul.f32 0.1, %v1766
          %v1768 = vrcp.pop %v1730
          %v1769 = vmul.f32 0.1, %v1768
          %v1770 = vrcp.pop %v1731
          %v1771 = vmul.f32 0.1, %v1770
          %v1772 = vrcp.pop %v1732
          %v1773 = vmul.f32 0.1, %v1772
          %v1774 = vrcp.pop %v1733
          %v1775 = vmul.f32 0.1, %v1774
          %v1776 = vrcp.pop %v1734
          %v1777 = vmul.f32 0.1, %v1776
          %v1778 = vrcp.pop %v1735
          %v1779 = vmul.f32 0.1, %v1778
          %v1780 = vrcp.pop %v1736
          %v1781 = vmul.f32 0.1, %v1780
          %v1782 = vrcp.pop %v1737
          %v1783 = vmul.f32 0.1, %v1782
          %v1784 = vrcp.pop %v1738
          %v1785 = vmul.f32 0.1, %v1784
          %v1786 = vrcp.pop %v1739
          %v1787 = vmul.f32 0.1, %v1786
          %v1788 = vrcp.pop %v1740
          %v1789 = vmul.f32 0.1, %v1788
          %v1790 = vrcp.pop %v1741
          %v1791 = vmul.f32 0.1, %v1790
          %v1792 = vrcp.pop %v1742
          %v1793 = vmul.f32 0.1, %v1792
          %v1794 = vrcp.pop %v1743
          %v1795 = vmul.f32 0.1, %v1794
          %v1796 = vrcp.pop %v1744
          %v1797 = vmul.f32 0.1, %v1796
          %v1798 = vrcp.pop %v1745
          %v1799 = vmul.f32 0.1, %v1798
          %v1800 = vrcp.pop %v1746
          %v1801 = vmul.f32 0.1, %v1800
          %v1802 = vrcp.pop %v1747
          %v1803 = vmul.f32 0.1, %v1802
          %v1804 = vrcp.pop %v1748
          %v1805 = vmul.f32 0.1, %v1804
          %v1806 = vrcp.pop %v1749
          %v1807 = vmul.f32 0.1, %v1806
          %v1808 = vrcp.pop %v1750
          %v1809 = vmul.f32 0.1, %v1808
          %v1810 = vrcp.pop %v1751
          %v1811 = vmul.f32 0.1, %v1810
          %v1812 = vrcp.pop %v1752
          %v1813 = vmul.f32 0.1, %v1812
          %v1814 = vrcp.pop %v1753
          %v1815 = vmul.f32 0.1, %v1814
          %v1816 = vrcp.pop %v1754
          %v1817 = vmul.f32 0.1, %v1816
          %v1818 = vrcp.pop %v1755
          %v1819 = vmul.f32 0.1, %v1818
          %v1820 = vld [vmem:[#allocation4] sm:$0xff]
          %v1821 = vld [vmem:[#allocation4 + $0x8] sm:$0xff]
          %v1822 = vld [vmem:[#allocation4 + $0x10] sm:$0xff]
          %v1823 = vld [vmem:[#allocation4 + $0x18] sm:$0xff]
          %v1824 = vld [vmem:[#allocation4 + $0x20] sm:$0xff]
          %v1825 = vld [vmem:[#allocation4 + $0x28] sm:$0xff]
          %v1826 = vld [vmem:[#allocation4 + $0x30] sm:$0xff]
          %v1827 = vld [vmem:[#allocation4 + $0x38] sm:$0xff]
          %v1828 = vld [vmem:[#allocation4 + $0x40] sm:$0xff]
          %v1829 = vld [vmem:[#allocation4 + $0x48] sm:$0xff]
          %v1830 = vld [vmem:[#allocation4 + $0x50] sm:$0xff]
          %v1831 = vld [vmem:[#allocation4 + $0x58] sm:$0xff]
          %v1832 = vld [vmem:[#allocation4 + $0x60] sm:$0xff]
          %v1833 = vld [vmem:[#allocation4 + $0x68] sm:$0xff]
          %v1834 = vld [vmem:[#allocation4 + $0x70] sm:$0xff]
          %v1835 = vld [vmem:[#allocation4 + $0x78] sm:$0xff]
          %v1836 = vld [vmem:[#allocation4 + $0x80] sm:$0xff]
          %v1837 = vld [vmem:[#allocation4 + $0x88] sm:$0xff]
          %v1838 = vld [vmem:[#allocation4 + $0x90] sm:$0xff]
          %v1839 = vld [vmem:[#allocation4 + $0x98] sm:$0xff]
          %v1840 = vld [vmem:[#allocation4 + $0xa0] sm:$0xff]
          %v1841 = vld [vmem:[#allocation4 + $0xa8] sm:$0xff]
          %v1842 = vld [vmem:[#allocation4 + $0xb0] sm:$0xff]
          %v1843 = vld [vmem:[#allocation4 + $0xb8] sm:$0xff]
          %v1844 = vld [vmem:[#allocation4 + $0xc0] sm:$0xff]
          %v1845 = vld [vmem:[#allocation4 + $0xc8] sm:$0xff]
          %v1846 = vld [vmem:[#allocation4 + $0xd0] sm:$0xff]
          %v1847 = vld [vmem:[#allocation4 + $0xd8] sm:$0xff]
          %v1848 = vld [vmem:[#allocation4 + $0xe0] sm:$0xff]
          %v1849 = vld [vmem:[#allocation4 + $0xe8] sm:$0xff]
          %v1850 = vld [vmem:[#allocation4 + $0xf0] sm:$0xff]
          %v1851 = vld [vmem:[#allocation4 + $0xf8] sm:$0xff]
          %1853 = vset.pattern.permute.xlu0 0
          %1854 = vperm.xlu0 %1853, %v1757
          %v1855 = vpop.permute.xlu0 %1854
          %1858 = vset.pattern.permute.xlu0 0
          %1859 = vperm.xlu0 %1858, %v1759
          %v1860 = vpop.permute.xlu0 %1859
          %1863 = vset.pattern.permute.xlu0 0
          %1864 = vperm.xlu0 %1863, %v1761
          %v1865 = vpop.permute.xlu0 %1864
          %1868 = vset.pattern.permute.xlu0 0
          %1869 = vperm.xlu0 %1868, %v1763
          %v1870 = vpop.permute.xlu0 %1869
          %1873 = vset.pattern.permute.xlu0 0
          %1874 = vperm.xlu0 %1873, %v1765
          %v1875 = vpop.permute.xlu0 %1874
          %1878 = vset.pattern.permute.xlu0 0
          %1879 = vperm.xlu0 %1878, %v1767
          %v1880 = vpop.permute.xlu0 %1879
          %1883 = vset.pattern.permute.xlu0 0
          %1884 = vperm.xlu0 %1883, %v1769
          %v1885 = vpop.permute.xlu0 %1884
          %1888 = vset.pattern.permute.xlu0 0
          %1889 = vperm.xlu0 %1888, %v1771
          %v1890 = vpop.permute.xlu0 %1889
          %1893 = vset.pattern.permute.xlu0 0
          %1894 = vperm.xlu0 %1893, %v1773
          %v1895 = vpop.permute.xlu0 %1894
          %1898 = vset.pattern.permute.xlu0 0
          %1899 = vperm.xlu0 %1898, %v1775
          %v1900 = vpop.permute.xlu0 %1899
          %1903 = vset.pattern.permute.xlu0 0
          %1904 = vperm.xlu0 %1903, %v1777
          %v1905 = vpop.permute.xlu0 %1904
          %1908 = vset.pattern.permute.xlu0 0
          %1909 = vperm.xlu0 %1908, %v1779
          %v1910 = vpop.permute.xlu0 %1909
          %1913 = vset.pattern.permute.xlu0 0
          %1914 = vperm.xlu0 %1913, %v1781
          %v1915 = vpop.permute.xlu0 %1914
          %1918 = vset.pattern.permute.xlu0 0
          %1919 = vperm.xlu0 %1918, %v1783
          %v1920 = vpop.permute.xlu0 %1919
          %1923 = vset.pattern.permute.xlu0 0
          %1924 = vperm.xlu0 %1923, %v1785
          %v1925 = vpop.permute.xlu0 %1924
          %1928 = vset.pattern.permute.xlu0 0
          %1929 = vperm.xlu0 %1928, %v1787
          %v1930 = vpop.permute.xlu0 %1929
          %1933 = vset.pattern.permute.xlu0 0
          %1934 = vperm.xlu0 %1933, %v1789
          %v1935 = vpop.permute.xlu0 %1934
          %1938 = vset.pattern.permute.xlu0 0
          %1939 = vperm.xlu0 %1938, %v1791
          %v1940 = vpop.permute.xlu0 %1939
          %1943 = vset.pattern.permute.xlu0 0
          %1944 = vperm.xlu0 %1943, %v1793
          %v1945 = vpop.permute.xlu0 %1944
          %1948 = vset.pattern.permute.xlu0 0
          %1949 = vperm.xlu0 %1948, %v1795
          %v1950 = vpop.permute.xlu0 %1949
          %1953 = vset.pattern.permute.xlu0 0
          %1954 = vperm.xlu0 %1953, %v1797
          %v1955 = vpop.permute.xlu0 %1954
          %1958 = vset.pattern.permute.xlu0 0
          %1959 = vperm.xlu0 %1958, %v1799
          %v1960 = vpop.permute.xlu0 %1959
          %1963 = vset.pattern.permute.xlu0 0
          %1964 = vperm.xlu0 %1963, %v1801
          %v1965 = vpop.permute.xlu0 %1964
          %1968 = vset.pattern.permute.xlu0 0
          %1969 = vperm.xlu0 %1968, %v1803
          %v1970 = vpop.permute.xlu0 %1969
          %1973 = vset.pattern.permute.xlu0 0
          %1974 = vperm.xlu0 %1973, %v1805
          %v1975 = vpop.permute.xlu0 %1974
          %1978 = vset.pattern.permute.xlu0 0
          %1979 = vperm.xlu0 %1978, %v1807
          %v1980 = vpop.permute.xlu0 %1979
          %1983 = vset.pattern.permute.xlu0 0
          %1984 = vperm.xlu0 %1983, %v1809
          %v1985 = vpop.permute.xlu0 %1984
          %1988 = vset.pattern.permute.xlu0 0
          %1989 = vperm.xlu0 %1988, %v1811
          %v1990 = vpop.permute.xlu0 %1989
          %1993 = vset.pattern.permute.xlu0 0
          %1994 = vperm.xlu0 %1993, %v1813
          %v1995 = vpop.permute.xlu0 %1994
          %1998 = vset.pattern.permute.xlu0 0
          %1999 = vperm.xlu0 %1998, %v1815
          %v2000 = vpop.permute.xlu0 %1999
          %2003 = vset.pattern.permute.xlu0 0
          %2004 = vperm.xlu0 %2003, %v1817
          %v2005 = vpop.permute.xlu0 %2004
          %2008 = vset.pattern.permute.xlu0 0
          %2009 = vperm.xlu0 %2008, %v1819
          %v2010 = vpop.permute.xlu0 %2009
          %v2012 = vmul.f32 %v1820, %v1855
          %v2013 = vmul.f32 %v1821, %v1860
          %v2014 = vmul.f32 %v1822, %v1865
          %v2015 = vmul.f32 %v1823, %v1870
          %v2016 = vmul.f32 %v1824, %v1875
          %v2017 = vmul.f32 %v1825, %v1880
          %v2018 = vmul.f32 %v1826, %v1885
          %v2019 = vmul.f32 %v1827, %v1890
          %v2020 = vmul.f32 %v1828, %v1895
          %v2021 = vmul.f32 %v1829, %v1900
          %v2022 = vmul.f32 %v1830, %v1905
          %v2023 = vmul.f32 %v1831, %v1910
          %v2024 = vmul.f32 %v1832, %v1915
          %v2025 = vmul.f32 %v1833, %v1920
          %v2026 = vmul.f32 %v1834, %v1925
          %v2027 = vmul.f32 %v1835, %v1930
          %v2028 = vmul.f32 %v1836, %v1935
          %v2029 = vmul.f32 %v1837, %v1940
          %v2030 = vmul.f32 %v1838, %v1945
          %v2031 = vmul.f32 %v1839, %v1950
          %v2032 = vmul.f32 %v1840, %v1955
          %v2033 = vmul.f32 %v1841, %v1960
          %v2034 = vmul.f32 %v1842, %v1965
          %v2035 = vmul.f32 %v1843, %v1970
          %v2036 = vmul.f32 %v1844, %v1975
          %v2037 = vmul.f32 %v1845, %v1980
          %v2038 = vmul.f32 %v1846, %v1985
          %v2039 = vmul.f32 %v1847, %v1990
          %v2040 = vmul.f32 %v1848, %v1995
          %v2041 = vmul.f32 %v1849, %v2000
          %v2042 = vmul.f32 %v1850, %v2005
          %v2043 = vmul.f32 %v1851, %v2010
          %v2044 = vsub.f32 %v1692, %v2012
          %v2045 = vsub.f32 %v1693, %v2013
          %v2046 = vsub.f32 %v1694, %v2014
          %v2047 = vsub.f32 %v1695, %v2015
          %v2048 = vsub.f32 %v1696, %v2016
          %v2049 = vsub.f32 %v1697, %v2017
          %v2050 = vsub.f32 %v1698, %v2018
          %v2051 = vsub.f32 %v1699, %v2019
          %v2052 = vsub.f32 %v1700, %v2020
          %v2053 = vsub.f32 %v1701, %v2021
          %v2054 = vsub.f32 %v1702, %v2022
          %v2055 = vsub.f32 %v1703, %v2023
          %v2056 = vsub.f32 %v1704, %v2024
          %v2057 = vsub.f32 %v1705, %v2025
          %v2058 = vsub.f32 %v1706, %v2026
          %v2059 = vsub.f32 %v1707, %v2027
          %v2060 = vsub.f32 %v1708, %v2028
          %v2061 = vsub.f32 %v1709, %v2029
          %v2062 = vsub.f32 %v1710, %v2030
          %v2063 = vsub.f32 %v1711, %v2031
          %v2064 = vsub.f32 %v1712, %v2032
          %v2065 = vsub.f32 %v1713, %v2033
          %v2066 = vsub.f32 %v1714, %v2034
          %v2067 = vsub.f32 %v1715, %v2035
          %v2068 = vsub.f32 %v1716, %v2036
          %v2069 = vsub.f32 %v1717, %v2037
          %v2070 = vsub.f32 %v1718, %v2038
          %v2071 = vsub.f32 %v1719, %v2039
          %v2072 = vsub.f32 %v1720, %v2040
          %v2073 = vsub.f32 %v1721, %v2041
          %v2074 = vsub.f32 %v1722, %v2042
          %v2075 = vsub.f32 %v1723, %v2043
          %2076 = vadd.xlane.f32.xlu0 %v2044
          %v2077 = vpop.xlane.xlu0 %2076
          %2078 = vadd.xlane.f32.xlu0 %v2045
          %v2079 = vpop.xlane.xlu0 %2078
          %2080 = vadd.xlane.f32.xlu0 %v2046
          %v2081 = vpop.xlane.xlu0 %2080
          %2082 = vadd.xlane.f32.xlu0 %v2047
          %v2083 = vpop.xlane.xlu0 %2082
          %2084 = vadd.xlane.f32.xlu0 %v2048
          %v2085 = vpop.xlane.xlu0 %2084
          %2086 = vadd.xlane.f32.xlu0 %v2049
          %v2087 = vpop.xlane.xlu0 %2086
          %2088 = vadd.xlane.f32.xlu0 %v2050
          %v2089 = vpop.xlane.xlu0 %2088
          %2090 = vadd.xlane.f32.xlu0 %v2051
          %v2091 = vpop.xlane.xlu0 %2090
          %2092 = vadd.xlane.f32.xlu0 %v2052
          %v2093 = vpop.xlane.xlu0 %2092
          %2094 = vadd.xlane.f32.xlu0 %v2053
          %v2095 = vpop.xlane.xlu0 %2094
          %2096 = vadd.xlane.f32.xlu0 %v2054
          %v2097 = vpop.xlane.xlu0 %2096
          %2098 = vadd.xlane.f32.xlu0 %v2055
          %v2099 = vpop.xlane.xlu0 %2098
          %2100 = vadd.xlane.f32.xlu0 %v2056
          %v2101 = vpop.xlane.xlu0 %2100
          %2102 = vadd.xlane.f32.xlu0 %v2057
          %v2103 = vpop.xlane.xlu0 %2102
          %2104 = vadd.xlane.f32.xlu0 %v2058
          %v2105 = vpop.xlane.xlu0 %2104
          %2106 = vadd.xlane.f32.xlu0 %v2059
          %v2107 = vpop.xlane.xlu0 %2106
          %2108 = vadd.xlane.f32.xlu0 %v2060
          %v2109 = vpop.xlane.xlu0 %2108
          %2110 = vadd.xlane.f32.xlu0 %v2061
          %v2111 = vpop.xlane.xlu0 %2110
          %2112 = vadd.xlane.f32.xlu0 %v2062
          %v2113 = vpop.xlane.xlu0 %2112
          %2114 = vadd.xlane.f32.xlu0 %v2063
          %v2115 = vpop.xlane.xlu0 %2114
          %2116 = vadd.xlane.f32.xlu0 %v2064
          %v2117 = vpop.xlane.xlu0 %2116
          %2118 = vadd.xlane.f32.xlu0 %v2065
          %v2119 = vpop.xlane.xlu0 %2118
          %2120 = vadd.xlane.f32.xlu0 %v2066
          %v2121 = vpop.xlane.xlu0 %2120
          %2122 = vadd.xlane.f32.xlu0 %v2067
          %v2123 = vpop.xlane.xlu0 %2122
          %2124 = vadd.xlane.f32.xlu0 %v2068
          %v2125 = vpop.xlane.xlu0 %2124
          %2126 = vadd.xlane.f32.xlu0 %v2069
          %v2127 = vpop.xlane.xlu0 %2126
          %2128 = vadd.xlane.f32.xlu0 %v2070
          %v2129 = vpop.xlane.xlu0 %2128
          %2130 = vadd.xlane.f32.xlu0 %v2071
          %v2131 = vpop.xlane.xlu0 %2130
          %2132 = vadd.xlane.f32.xlu0 %v2072
          %v2133 = vpop.xlane.xlu0 %2132
          %2134 = vadd.xlane.f32.xlu0 %v2073
          %v2135 = vpop.xlane.xlu0 %2134
          %2136 = vadd.xlane.f32.xlu0 %v2074
          %v2137 = vpop.xlane.xlu0 %2136
          %2138 = vadd.xlane.f32.xlu0 %v2075
          %v2139 = vpop.xlane.xlu0 %2138
          %v2140 = vrcp.pop 128.0
          %v2141 = vmul.f32 %v2077, %v2140
          %v2142 = vmul.f32 %v2079, %v2140
          %v2143 = vmul.f32 %v2081, %v2140
          %v2144 = vmul.f32 %v2083, %v2140
          %v2145 = vmul.f32 %v2085, %v2140
          %v2146 = vmul.f32 %v2087, %v2140
          %v2147 = vmul.f32 %v2089, %v2140
          %v2148 = vmul.f32 %v2091, %v2140
          %v2149 = vmul.f32 %v2093, %v2140
          %v2150 = vmul.f32 %v2095, %v2140
          %v2151 = vmul.f32 %v2097, %v2140
          %v2152 = vmul.f32 %v2099, %v2140
          %v2153 = vmul.f32 %v2101, %v2140
          %v2154 = vmul.f32 %v2103, %v2140
          %v2155 = vmul.f32 %v2105, %v2140
          %v2156 = vmul.f32 %v2107, %v2140
          %v2157 = vmul.f32 %v2109, %v2140
          %v2158 = vmul.f32 %v2111, %v2140
          %v2159 = vmul.f32 %v2113, %v2140
          %v2160 = vmul.f32 %v2115, %v2140
          %v2161 = vmul.f32 %v2117, %v2140
          %v2162 = vmul.f32 %v2119, %v2140
          %v2163 = vmul.f32 %v2121, %v2140
          %v2164 = vmul.f32 %v2123, %v2140
          %v2165 = vmul.f32 %v2125, %v2140
          %v2166 = vmul.f32 %v2127, %v2140
          %v2167 = vmul.f32 %v2129, %v2140
          %v2168 = vmul.f32 %v2131, %v2140
          %v2169 = vmul.f32 %v2133, %v2140
          %v2170 = vmul.f32 %v2135, %v2140
          %v2171 = vmul.f32 %v2137, %v2140
          %v2172 = vmul.f32 %v2139, %v2140
          %v2173 = vsub.f32 %v2044, %v2141
          %v2174 = vsub.f32 %v2045, %v2142
          %v2175 = vsub.f32 %v2046, %v2143
          %v2176 = vsub.f32 %v2047, %v2144
          %v2177 = vsub.f32 %v2048, %v2145
          %v2178 = vsub.f32 %v2049, %v2146
          %v2179 = vsub.f32 %v2050, %v2147
          %v2180 = vsub.f32 %v2051, %v2148
          %v2181 = vsub.f32 %v2052, %v2149
          %v2182 = vsub.f32 %v2053, %v2150
          %v2183 = vsub.f32 %v2054, %v2151
          %v2184 = vsub.f32 %v2055, %v2152
          %v2185 = vsub.f32 %v2056, %v2153
          %v2186 = vsub.f32 %v2057, %v2154
          %v2187 = vsub.f32 %v2058, %v2155
          %v2188 = vsub.f32 %v2059, %v2156
          %v2189 = vsub.f32 %v2060, %v2157
          %v2190 = vsub.f32 %v2061, %v2158
          %v2191 = vsub.f32 %v2062, %v2159
          %v2192 = vsub.f32 %v2063, %v2160
          %v2193 = vsub.f32 %v2064, %v2161
          %v2194 = vsub.f32 %v2065, %v2162
          %v2195 = vsub.f32 %v2066, %v2163
          %v2196 = vsub.f32 %v2067, %v2164
          %v2197 = vsub.f32 %v2068, %v2165
          %v2198 = vsub.f32 %v2069, %v2166
          %v2199 = vsub.f32 %v2070, %v2167
          %v2200 = vsub.f32 %v2071, %v2168
          %v2201 = vsub.f32 %v2072, %v2169
          %v2202 = vsub.f32 %v2073, %v2170
          %v2203 = vsub.f32 %v2074, %v2171
          %v2204 = vsub.f32 %v2075, %v2172
          %v2205 = vmul.f32 %v2173, %v2173
          %v2206 = vmul.f32 %v2174, %v2174
          %v2207 = vmul.f32 %v2175, %v2175
          %v2208 = vmul.f32 %v2176, %v2176
          %v2209 = vmul.f32 %v2177, %v2177
          %v2210 = vmul.f32 %v2178, %v2178
          %v2211 = vmul.f32 %v2179, %v2179
          %v2212 = vmul.f32 %v2180, %v2180
          %v2213 = vmul.f32 %v2181, %v2181
          %v2214 = vmul.f32 %v2182, %v2182
          %v2215 = vmul.f32 %v2183, %v2183
          %v2216 = vmul.f32 %v2184, %v2184
          %v2217 = vmul.f32 %v2185, %v2185
          %v2218 = vmul.f32 %v2186, %v2186
          %v2219 = vmul.f32 %v2187, %v2187
          %v2220 = vmul.f32 %v2188, %v2188
          %v2221 = vmul.f32 %v2189, %v2189
          %v2222 = vmul.f32 %v2190, %v2190
          %v2223 = vmul.f32 %v2191, %v2191
          %v2224 = vmul.f32 %v2192, %v2192
          %v2225 = vmul.f32 %v2193, %v2193
          %v2226 = vmul.f32 %v2194, %v2194
          %v2227 = vmul.f32 %v2195, %v2195
          %v2228 = vmul.f32 %v2196, %v2196
          %v2229 = vmul.f32 %v2197, %v2197
          %v2230 = vmul.f32 %v2198, %v2198
          %v2231 = vmul.f32 %v2199, %v2199
          %v2232 = vmul.f32 %v2200, %v2200
          %v2233 = vmul.f32 %v2201, %v2201
          %v2234 = vmul.f32 %v2202, %v2202
          %v2235 = vmul.f32 %v2203, %v2203
          %v2236 = vmul.f32 %v2204, %v2204
          %2237 = vadd.xlane.f32.xlu0 %v2205
          %v2238 = vpop.xlane.xlu0 %2237
          %2239 = vadd.xlane.f32.xlu0 %v2206
          %v2240 = vpop.xlane.xlu0 %2239
          %2241 = vadd.xlane.f32.xlu0 %v2207
          %v2242 = vpop.xlane.xlu0 %2241
          %2243 = vadd.xlane.f32.xlu0 %v2208
          %v2244 = vpop.xlane.xlu0 %2243
          %2245 = vadd.xlane.f32.xlu0 %v2209
          %v2246 = vpop.xlane.xlu0 %2245
          %2247 = vadd.xlane.f32.xlu0 %v2210
          %v2248 = vpop.xlane.xlu0 %2247
          %2249 = vadd.xlane.f32.xlu0 %v2211
          %v2250 = vpop.xlane.xlu0 %2249
          %2251 = vadd.xlane.f32.xlu0 %v2212
          %v2252 = vpop.xlane.xlu0 %2251
          %2253 = vadd.xlane.f32.xlu0 %v2213
          %v2254 = vpop.xlane.xlu0 %2253
          %2255 = vadd.xlane.f32.xlu0 %v2214
          %v2256 = vpop.xlane.xlu0 %2255
          %2257 = vadd.xlane.f32.xlu0 %v2215
          %v2258 = vpop.xlane.xlu0 %2257
          %2259 = vadd.xlane.f32.xlu0 %v2216
          %v2260 = vpop.xlane.xlu0 %2259
          %2261 = vadd.xlane.f32.xlu0 %v2217
          %v2262 = vpop.xlane.xlu0 %2261
          %2263 = vadd.xlane.f32.xlu0 %v2218
          %v2264 = vpop.xlane.xlu0 %2263
          %2265 = vadd.xlane.f32.xlu0 %v2219
          %v2266 = vpop.xlane.xlu0 %2265
          %2267 = vadd.xlane.f32.xlu0 %v2220
          %v2268 = vpop.xlane.xlu0 %2267
          %2269 = vadd.xlane.f32.xlu0 %v2221
          %v2270 = vpop.xlane.xlu0 %2269
          %2271 = vadd.xlane.f32.xlu0 %v2222
          %v2272 = vpop.xlane.xlu0 %2271
          %2273 = vadd.xlane.f32.xlu0 %v2223
          %v2274 = vpop.xlane.xlu0 %2273
          %2275 = vadd.xlane.f32.xlu0 %v2224
          %v2276 = vpop.xlane.xlu0 %2275
          %2277 = vadd.xlane.f32.xlu0 %v2225
          %v2278 = vpop.xlane.xlu0 %2277
          %2279 = vadd.xlane.f32.xlu0 %v2226
          %v2280 = vpop.xlane.xlu0 %2279
          %2281 = vadd.xlane.f32.xlu0 %v2227
          %v2282 = vpop.xlane.xlu0 %2281
          %2283 = vadd.xlane.f32.xlu0 %v2228
          %v2284 = vpop.xlane.xlu0 %2283
          %2285 = vadd.xlane.f32.xlu0 %v2229
          %v2286 = vpop.xlane.xlu0 %2285
          %2287 = vadd.xlane.f32.xlu0 %v2230
          %v2288 = vpop.xlane.xlu0 %2287
          %2289 = vadd.xlane.f32.xlu0 %v2231
          %v2290 = vpop.xlane.xlu0 %2289
          %2291 = vadd.xlane.f32.xlu0 %v2232
          %v2292 = vpop.xlane.xlu0 %2291
          %2293 = vadd.xlane.f32.xlu0 %v2233
          %v2294 = vpop.xlane.xlu0 %2293
          %2295 = vadd.xlane.f32.xlu0 %v2234
          %v2296 = vpop.xlane.xlu0 %2295
          %2297 = vadd.xlane.f32.xlu0 %v2235
          %v2298 = vpop.xlane.xlu0 %2297
          %2299 = vadd.xlane.f32.xlu0 %v2236
          %v2300 = vpop.xlane.xlu0 %2299
          %v2301 = vmul.f32 %v2238, %v2140
          %v2302 = vmul.f32 %v2240, %v2140
          %v2303 = vmul.f32 %v2242, %v2140
          %v2304 = vmul.f32 %v2244, %v2140
          %v2305 = vmul.f32 %v2246, %v2140
          %v2306 = vmul.f32 %v2248, %v2140
          %v2307 = vmul.f32 %v2250, %v2140
          %v2308 = vmul.f32 %v2252, %v2140
          %v2309 = vmul.f32 %v2254, %v2140
          %v2310 = vmul.f32 %v2256, %v2140
          %v2311 = vmul.f32 %v2258, %v2140
          %v2312 = vmul.f32 %v2260, %v2140
          %v2313 = vmul.f32 %v2262, %v2140
          %v2314 = vmul.f32 %v2264, %v2140
          %v2315 = vmul.f32 %v2266, %v2140
          %v2316 = vmul.f32 %v2268, %v2140
          %v2317 = vmul.f32 %v2270, %v2140
          %v2318 = vmul.f32 %v2272, %v2140
          %v2319 = vmul.f32 %v2274, %v2140
          %v2320 = vmul.f32 %v2276, %v2140
          %v2321 = vmul.f32 %v2278, %v2140
          %v2322 = vmul.f32 %v2280, %v2140
          %v2323 = vmul.f32 %v2282, %v2140
          %v2324 = vmul.f32 %v2284, %v2140
          %v2325 = vmul.f32 %v2286, %v2140
          %v2326 = vmul.f32 %v2288, %v2140
          %v2327 = vmul.f32 %v2290, %v2140
          %v2328 = vmul.f32 %v2292, %v2140
          %v2329 = vmul.f32 %v2294, %v2140
          %v2330 = vmul.f32 %v2296, %v2140
          %v2331 = vmul.f32 %v2298, %v2140
          %v2332 = vmul.f32 %v2300, %v2140
          %v2333 = vadd.f32 %v2301, 1e-06
          %v2334 = vadd.f32 %v2302, 1e-06
          %v2335 = vadd.f32 %v2303, 1e-06
          %v2336 = vadd.f32 %v2304, 1e-06
          %v2337 = vadd.f32 %v2305, 1e-06
          %v2338 = vadd.f32 %v2306, 1e-06
          %v2339 = vadd.f32 %v2307, 1e-06
          %v2340 = vadd.f32 %v2308, 1e-06
          %v2341 = vadd.f32 %v2309, 1e-06
          %v2342 = vadd.f32 %v2310, 1e-06
          %v2343 = vadd.f32 %v2311, 1e-06
          %v2344 = vadd.f32 %v2312, 1e-06
          %v2345 = vadd.f32 %v2313, 1e-06
          %v2346 = vadd.f32 %v2314, 1e-06
          %v2347 = vadd.f32 %v2315, 1e-06
          %v2348 = vadd.f32 %v2316, 1e-06
          %v2349 = vadd.f32 %v2317, 1e-06
          %v2350 = vadd.f32 %v2318, 1e-06
          %v2351 = vadd.f32 %v2319, 1e-06
          %v2352 = vadd.f32 %v2320, 1e-06
          %v2353 = vadd.f32 %v2321, 1e-06
          %v2354 = vadd.f32 %v2322, 1e-06
          %v2355 = vadd.f32 %v2323, 1e-06
          %v2356 = vadd.f32 %v2324, 1e-06
          %v2357 = vadd.f32 %v2325, 1e-06
          %v2358 = vadd.f32 %v2326, 1e-06
          %v2359 = vadd.f32 %v2327, 1e-06
          %v2360 = vadd.f32 %v2328, 1e-06
          %v2361 = vadd.f32 %v2329, 1e-06
          %v2362 = vadd.f32 %v2330, 1e-06
          %v2363 = vadd.f32 %v2331, 1e-06
          %v2364 = vadd.f32 %v2332, 1e-06
          %v2365 = vrsqrt.pop %v2333
          %v2366 = vrsqrt.pop %v2334
          %v2367 = vrsqrt.pop %v2335
          %v2368 = vrsqrt.pop %v2336
          %v2369 = vrsqrt.pop %v2337
          %v2370 = vrsqrt.pop %v2338
          %v2371 = vrsqrt.pop %v2339
          %v2372 = vrsqrt.pop %v2340
          %v2373 = vrsqrt.pop %v2341
          %v2374 = vrsqrt.pop %v2342
          %v2375 = vrsqrt.pop %v2343
          %v2376 = vrsqrt.pop %v2344
          %v2377 = vrsqrt.pop %v2345
          %v2378 = vrsqrt.pop %v2346
          %v2379 = vrsqrt.pop %v2347
          %v2380 = vrsqrt.pop %v2348
          %v2381 = vrsqrt.pop %v2349
          %v2382 = vrsqrt.pop %v2350
          %v2383 = vrsqrt.pop %v2351
          %v2384 = vrsqrt.pop %v2352
          %v2385 = vrsqrt.pop %v2353
          %v2386 = vrsqrt.pop %v2354
          %v2387 = vrsqrt.pop %v2355
          %v2388 = vrsqrt.pop %v2356
          %v2389 = vrsqrt.pop %v2357
          %v2390 = vrsqrt.pop %v2358
          %v2391 = vrsqrt.pop %v2359
          %v2392 = vrsqrt.pop %v2360
          %v2393 = vrsqrt.pop %v2361
          %v2394 = vrsqrt.pop %v2362
          %v2395 = vrsqrt.pop %v2363
          %v2396 = vrsqrt.pop %v2364
          %v2397 = vmul.f32 %v2173, %v2365
          %v2398 = vmul.f32 %v2174, %v2366
          %v2399 = vmul.f32 %v2175, %v2367
          %v2400 = vmul.f32 %v2176, %v2368
          %v2401 = vmul.f32 %v2177, %v2369
          %v2402 = vmul.f32 %v2178, %v2370
          %v2403 = vmul.f32 %v2179, %v2371
          %v2404 = vmul.f32 %v2180, %v2372
          %v2405 = vmul.f32 %v2181, %v2373
          %v2406 = vmul.f32 %v2182, %v2374
          %v2407 = vmul.f32 %v2183, %v2375
          %v2408 = vmul.f32 %v2184, %v2376
          %v2409 = vmul.f32 %v2185, %v2377
          %v2410 = vmul.f32 %v2186, %v2378
          %v2411 = vmul.f32 %v2187, %v2379
          %v2412 = vmul.f32 %v2188, %v2380
          %v2413 = vmul.f32 %v2189, %v2381
          %v2414 = vmul.f32 %v2190, %v2382
          %v2415 = vmul.f32 %v2191, %v2383
          %v2416 = vmul.f32 %v2192, %v2384
          %v2417 = vmul.f32 %v2193, %v2385
          %v2418 = vmul.f32 %v2194, %v2386
          %v2419 = vmul.f32 %v2195, %v2387
          %v2420 = vmul.f32 %v2196, %v2388
          %v2421 = vmul.f32 %v2197, %v2389
          %v2422 = vmul.f32 %v2198, %v2390
          %v2423 = vmul.f32 %v2199, %v2391
          %v2424 = vmul.f32 %v2200, %v2392
          %v2425 = vmul.f32 %v2201, %v2393
          %v2426 = vmul.f32 %v2202, %v2394
          %v2427 = vmul.f32 %v2203, %v2395
          %v2428 = vmul.f32 %v2204, %v2396
          %v2429 = vld [vmem:[%s2] sm:$0x1]
          %v2430 = vld [vmem:[%s3] sm:$0x1]
          %v2432 = vlaneseq
          %v2433 = vshrl.u32 %v2432, 7
          %v2434 = vsub.s32 0, %v2433
          %v2435 = vrot.slane %v2429, %v2434
          %v2437 = vmul.f32 %v2397, %v2435
          %v2438 = vmul.f32 %v2398, %v2435
          %v2439 = vmul.f32 %v2399, %v2435
          %v2440 = vmul.f32 %v2400, %v2435
          %v2441 = vmul.f32 %v2401, %v2435
          %v2442 = vmul.f32 %v2402, %v2435
          %v2443 = vmul.f32 %v2403, %v2435
          %v2444 = vmul.f32 %v2404, %v2435
          %v2445 = vmul.f32 %v2405, %v2435
          %v2446 = vmul.f32 %v2406, %v2435
          %v2447 = vmul.f32 %v2407, %v2435
          %v2448 = vmul.f32 %v2408, %v2435
          %v2449 = vmul.f32 %v2409, %v2435
          %v2450 = vmul.f32 %v2410, %v2435
          %v2451 = vmul.f32 %v2411, %v2435
          %v2452 = vmul.f32 %v2412, %v2435
          %v2453 = vmul.f32 %v2413, %v2435
          %v2454 = vmul.f32 %v2414, %v2435
          %v2455 = vmul.f32 %v2415, %v2435
          %v2456 = vmul.f32 %v2416, %v2435
          %v2457 = vmul.f32 %v2417, %v2435
          %v2458 = vmul.f32 %v2418, %v2435
          %v2459 = vmul.f32 %v2419, %v2435
          %v2460 = vmul.f32 %v2420, %v2435
          %v2461 = vmul.f32 %v2421, %v2435
          %v2462 = vmul.f32 %v2422, %v2435
          %v2463 = vmul.f32 %v2423, %v2435
          %v2464 = vmul.f32 %v2424, %v2435
          %v2465 = vmul.f32 %v2425, %v2435
          %v2466 = vmul.f32 %v2426, %v2435
          %v2467 = vmul.f32 %v2427, %v2435
          %v2468 = vmul.f32 %v2428, %v2435
          %v2470 = vlaneseq
          %v2471 = vshrl.u32 %v2470, 7
          %v2472 = vsub.s32 0, %v2471
          %v2473 = vrot.slane %v2430, %v2472
          %v2475 = vadd.f32 %v2437, %v2473
          %v2476 = vadd.f32 %v2438, %v2473
          %v2477 = vadd.f32 %v2439, %v2473
          %v2478 = vadd.f32 %v2440, %v2473
          %v2479 = vadd.f32 %v2441, %v2473
          %v2480 = vadd.f32 %v2442, %v2473
          %v2481 = vadd.f32 %v2443, %v2473
          %v2482 = vadd.f32 %v2444, %v2473
          %v2483 = vadd.f32 %v2445, %v2473
          %v2484 = vadd.f32 %v2446, %v2473
          %v2485 = vadd.f32 %v2447, %v2473
          %v2486 = vadd.f32 %v2448, %v2473
          %v2487 = vadd.f32 %v2449, %v2473
          %v2488 = vadd.f32 %v2450, %v2473
          %v2489 = vadd.f32 %v2451, %v2473
          %v2490 = vadd.f32 %v2452, %v2473
          %v2491 = vadd.f32 %v2453, %v2473
          %v2492 = vadd.f32 %v2454, %v2473
          %v2493 = vadd.f32 %v2455, %v2473
          %v2494 = vadd.f32 %v2456, %v2473
          %v2495 = vadd.f32 %v2457, %v2473
          %v2496 = vadd.f32 %v2458, %v2473
          %v2497 = vadd.f32 %v2459, %v2473
          %v2498 = vadd.f32 %v2460, %v2473
          %v2499 = vadd.f32 %v2461, %v2473
          %v2500 = vadd.f32 %v2462, %v2473
          %v2501 = vadd.f32 %v2463, %v2473
          %v2502 = vadd.f32 %v2464, %v2473
          %v2503 = vadd.f32 %v2465, %v2473
          %v2504 = vadd.f32 %v2466, %v2473
          %v2505 = vadd.f32 %v2467, %v2473
          %v2506 = vadd.f32 %v2468, %v2473
          %2507 = vst [vmem:[%s284] sm:$0xff] %v2475
          %2508 = vst [vmem:[%s284 + $0x8] sm:$0xff] %v2476
          %2509 = vst [vmem:[%s284 + $0x10] sm:$0xff] %v2477
          %2510 = vst [vmem:[%s284 + $0x18] sm:$0xff] %v2478
          %2511 = vst [vmem:[%s284 + $0x20] sm:$0xff] %v2479
          %2512 = vst [vmem:[%s284 + $0x28] sm:$0xff] %v2480
          %2513 = vst [vmem:[%s284 + $0x30] sm:$0xff] %v2481
          %2514 = vst [vmem:[%s284 + $0x38] sm:$0xff] %v2482
          %2515 = vst [vmem:[%s284 + $0x40] sm:$0xff] %v2483
          %2516 = vst [vmem:[%s284 + $0x48] sm:$0xff] %v2484
          %2517 = vst [vmem:[%s284 + $0x50] sm:$0xff] %v2485
          %2518 = vst [vmem:[%s284 + $0x58] sm:$0xff] %v2486
          %2519 = vst [vmem:[%s284 + $0x60] sm:$0xff] %v2487
          %2520 = vst [vmem:[%s284 + $0x68] sm:$0xff] %v2488
          %2521 = vst [vmem:[%s284 + $0x70] sm:$0xff] %v2489
          %2522 = vst [vmem:[%s284 + $0x78] sm:$0xff] %v2490
          %2523 = vst [vmem:[%s284 + $0x80] sm:$0xff] %v2491
          %2524 = vst [vmem:[%s284 + $0x88] sm:$0xff] %v2492
          %2525 = vst [vmem:[%s284 + $0x90] sm:$0xff] %v2493
          %2526 = vst [vmem:[%s284 + $0x98] sm:$0xff] %v2494
          %2527 = vst [vmem:[%s284 + $0xa0] sm:$0xff] %v2495
          %2528 = vst [vmem:[%s284 + $0xa8] sm:$0xff] %v2496
          %2529 = vst [vmem:[%s284 + $0xb0] sm:$0xff] %v2497
          %2530 = vst [vmem:[%s284 + $0xb8] sm:$0xff] %v2498
          %2531 = vst [vmem:[%s284 + $0xc0] sm:$0xff] %v2499
          %2532 = vst [vmem:[%s284 + $0xc8] sm:$0xff] %v2500
          %2533 = vst [vmem:[%s284 + $0xd0] sm:$0xff] %v2501
          %2534 = vst [vmem:[%s284 + $0xd8] sm:$0xff] %v2502
          %2535 = vst [vmem:[%s284 + $0xe0] sm:$0xff] %v2503
          %2536 = vst [vmem:[%s284 + $0xe8] sm:$0xff] %v2504
          %2537 = vst [vmem:[%s284 + $0xf0] sm:$0xff] %v2505
          %2538 = vst [vmem:[%s284 + $0xf8] sm:$0xff] %v2506
        $region52: #{tpu_custom_call.1} parent=35 // pred_fallthru
          _
        %s2539 = sand.u32 %s151, 1
        %s2540 = scalar_lea.sflag [#allocation7], %s2539
        %s2541 = sand.u32 %s151, 1
        %s2542 = smul.addr %s2541, 256
        %s2543 = scalar_lea.vmem [#allocation10], %s2542
        // Predicated region
        $region53: #{tpu_custom_call.1} parent=35 // pred_check
          %p2544 = pneg %p161
        $region54: #{tpu_custom_call.1} parent=35 // pred_check_branch
          %2546 = sbr.rel (%p2544) target = $region56
        $region55: #{tpu_custom_call.1} parent=35 // pred_region
          %s2547 = smul.u32 32, %s30
          %s2549 = ssub.s32 4096, 4096
          %2550 = vsyncadd %s2540, %s2549
          %s2551 = smul.addr %s29, 32
          %s2552 = sadd.s32 %s2547, %s2551
          %s2553 = smul.addr %s2552, 128
          %s2554 = scalar_lea.hbm %s4, %s2553
          %s2555 = sshll.u32 %s2543, 4
          %s2556 = int_to_ptr.vmem [resolvable:$true] %s2555
          %2561 = dma.vmem_to_hbm [thread:$0]  %s2556, 4096, %s2554, %s2540, 128, 128, 8
        $region56: #{tpu_custom_call.1} parent=35 // pred_fallthru
          _
      $region36: #{tpu_custom_call.1} parent=5 // pred_fallthru
        _
      %p2562 = scmp.le.s32.totalorder 2, %s19
      // Predicated region
      $region57: #{tpu_custom_call.1} parent=5 // pred_check
        %p2563 = pneg %p2562
      $region58: #{tpu_custom_call.1} parent=5 // pred_check_branch
        %2565 = sbr.rel (%p2563) target = $region60
      $region59: #{tpu_custom_call.1} parent=5 // pred_region
        %s2566 = ssub.s32 %s19, 2
        // Predicated region
        $region61: #{tpu_custom_call.1} parent=59 // pred_check
          %p2567 = pneg %p167
        $region62: #{tpu_custom_call.1} parent=59 // pred_check_branch
          %2569 = sbr.rel (%p2567) target = $region64
        $region63: #{tpu_custom_call.1} parent=59 // pred_region
          %s2570 = sand.u32 %s152, 1
          %s2571 = scalar_lea.sflag [#allocation7], %s2570
          %s2572 = sand.u32 %s152, 1
          %s2573 = smul.addr %s2572, 256
          %s2574 = scalar_lea.vmem [#allocation10], %s2573
          %2575 = dma.done %s2571, 4096
        $region64: #{tpu_custom_call.1} parent=59 // pred_fallthru
          _
      $region60: #{tpu_custom_call.1} parent=5 // pred_fallthru
        _
    $region6: #{tpu_custom_call.1} parent=1 // loop_footer
      %s23 = sadd.s32 1, %s19
    $region7: #{tpu_custom_call.1} parent=1 // loop_footer_branch
      %18 = sbr.rel target = $region3
    $region8: #{tpu_custom_call.1} parent=1 // loop_exit
      _
    %2576 = vsyncpa [#allocation6], 1
    %s2577 = scalar_lea.sflag [#allocation6], 1
    %2578 = vsyncpa %s2577, 1
    %2579 = vsyncpa [#allocation9], 1
    %s2580 = scalar_lea.sflag [#allocation9], 1
    %2581 = vsyncpa %s2580, 1
    %2582 = vsyncpa [#allocation7], 1
    %s2583 = scalar_lea.sflag [#allocation7], 1
    %2584 = vsyncpa %s2583, 1

</llo_original>
